<compile_context>
chip_gen: v5e
topology: v5e:2x2
jax: 0.10.0
libtpu: 0.0.40
codegen_flags: <defaults>
</compile_context>

<pallas_src>
import jax
import jax.numpy as jnp
from jax.experimental import pallas as pl
from jax.experimental.pallas import tpu as pltpu

# --- config mirroring `opt` -------------------------------------------------
CHANNELS = 1
IMG_SIZE = 16
N_CLASSES = 10
N_FEATURES = CHANNELS * IMG_SIZE * IMG_SIZE   # 256

X_GROUPS, X_PIECES = 240, 5     # x_map: Linear(n_features, 240*5) -> maxout 5
Y_GROUPS, Y_PIECES = 50, 5      # y_map: Linear(n_classes, 50*5)   -> maxout 5
J_GROUPS, J_PIECES = 240, 4     # j_map: Linear(290, 240*4)        -> maxout 4

XG_PAD = 256    # 240 -> 256 (lane-dense piece slices)
YG_PAD = 128    # 50  -> 128
JG_PAD = 256    # 240 -> 256


def _round_up(v, m):
    return (v + m - 1) // m * m


def _disc_kernel(x_ref, y_ref,
                 wx_ref, bx_ref,
                 wy_ref, by_ref,
                 wjx_ref, wjy_ref, bj_ref,
                 wm_ref, bm_ref,
                 out_ref):
    x = x_ref[...]            # (TB, 256)  bf16
    y = y_ref[...]            # (TB, 10)   bf16

    # ---- x_map: one wide matmul (TB, 5*256); max over 256-lane piece slices.
    ax = jnp.dot(x, wx_ref[...], preferred_element_type=jnp.float32) + bx_ref[...]
    hx = ax[:, :XG_PAD]
    for k in range(1, X_PIECES):
        hx = jnp.maximum(hx, ax[:, k * XG_PAD:(k + 1) * XG_PAD])

    # ---- y_map: one matmul (TB, 5*128); max over 128-lane piece slices.
    ay = jnp.dot(y, wy_ref[...], preferred_element_type=jnp.float32) + by_ref[...]
    hy = ay[:, :YG_PAD]
    for k in range(1, Y_PIECES):
        hy = jnp.maximum(hy, ay[:, k * YG_PAD:(k + 1) * YG_PAD])

    # ---- j_map on concat([hx, hy]): exact split matmul (zero-padded rows).
    aj = (jnp.dot(hx.astype(jnp.bfloat16), wjx_ref[...],
                  preferred_element_type=jnp.float32)
          + jnp.dot(hy.astype(jnp.bfloat16), wjy_ref[...],
                    preferred_element_type=jnp.float32)
          + bj_ref[...])
    hj = aj[:, :JG_PAD]
    for k in range(1, J_PIECES):
        hj = jnp.maximum(hj, aj[:, k * JG_PAD:(k + 1) * JG_PAD])

    # ---- final Linear(240, 1): VPU multiply + XLU lane reduce + Sigmoid.
    logits = jnp.sum(hj * wm_ref[...], axis=-1, keepdims=True) + bm_ref[...]
    out_ref[...] = jax.nn.sigmoid(logits).astype(out_ref.dtype)


def _resident(shape):
    """Full-array block that stays VMEM-resident across all grid steps."""
    nd = len(shape)
    return pl.BlockSpec(shape, lambda i, _nd=nd: (0,) * _nd)


@jax.jit
def discriminator_forward(x, y, params):
    """x: (B, C, H, W) float32 NCHW; y: (B, n_classes) float32 -> (B, 1) f32."""
    B = x.shape[0]
    x_flat = x.reshape(B, N_FEATURES).astype(jnp.bfloat16)  # torch .view(-1, nf)
    y_flat = y.reshape(B, N_CLASSES).astype(jnp.bfloat16)

    # Batch tiling: sublane-aligned tile, padded batch, pipelined + 'parallel'.
    TB = min(512, _round_up(B, 8))
    B_pad = _round_up(B, TB)
    if B_pad != B:
        x_flat = jnp.pad(x_flat, ((0, B_pad - B), (0, 0)))
        y_flat = jnp.pad(y_flat, ((0, B_pad - B), (0, 0)))
    num_tiles = B_pad // TB

    (wx, bx, wy, by, wjx, wjy, bj, wm, bm) = params

    out = pl.pallas_call(
        _disc_kernel,
        out_shape=jax.ShapeDtypeStruct((B_pad, 1), jnp.float32),
        grid_spec=pltpu.PrefetchScalarGridSpec(
            num_scalar_prefetch=0,
            grid=(num_tiles,),
            in_specs=[
                pl.BlockSpec((TB, N_FEATURES), lambda i: (i, 0)),
                pl.BlockSpec((TB, N_CLASSES), lambda i: (i, 0)),
                _resident(wx.shape), _resident(bx.shape),
                _resident(wy.shape), _resident(by.shape),
                _resident(wjx.shape), _resident(wjy.shape), _resident(bj.shape),
                _resident(wm.shape), _resident(bm.shape),
            ],
            out_specs=pl.BlockSpec((TB, 1), lambda i: (i, 0)),
        ),
        compiler_params=pltpu.CompilerParams(
            dimension_semantics=("parallel",)),
    )(x_flat, y_flat, wx, bx, wy, by, wjx, wjy, bj, wm, bm)
    return out[:B]


# --- parameters -------------------------------------------------------------
def make_raw_params(key):
    """Deterministic synthetic parameters matching the torch Linear shapes."""
    keys = jax.random.split(key, 8)

    def linear(kw, kb, fan_in, fan_out):
        bound = 1.0 / jnp.sqrt(jnp.float32(fan_in))
        w = jax.random.uniform(kw, (fan_in, fan_out), jnp.float32, -bound, bound)
        b = jax.random.uniform(kb, (fan_out,), jnp.float32, -bound, bound)
        return w, b

    w_x, b_x = linear(keys[0], keys[1], N_FEATURES, X_GROUPS * X_PIECES)   # (256,1200)
    w_y, b_y = linear(keys[2], keys[3], N_CLASSES, Y_GROUPS * Y_PIECES)    # (10, 250)
    w_j, b_j = linear(keys[4], keys[5], X_GROUPS + Y_GROUPS,
                      J_GROUPS * J_PIECES)                                  # (290, 960)
    w_m, b_m = linear(keys[6], keys[7], J_GROUPS, 1)                        # (240, 1)
    return (w_x, b_x, w_y, b_y, w_j, b_j, w_m, b_m)


def pack_params(raw):
    """Pack torch-layout weights into fused, lane-padded, bf16 kernel weights.

    Torch output column j of a maxout Linear maps to group j//K, piece j%K, so
    piece k's columns are w[:, k::K]; pieces are laid side-by-side in padded
    128-multiple slices so the kernel can max over static lane-aligned slices.
    """
    (w_x, b_x, w_y, b_y, w_j, b_j, w_m, b_m) = raw

    def pack(w, b, groups, pieces, g_pad, row_pad=None):
        fan_in = w.shape[0]
        rows = fan_in if row_pad is None else row_pad
        wp = jnp.zeros((rows, pieces * g_pad), jnp.float32)
        bp = jnp.zeros((1, pieces * g_pad), jnp.float32)
        for k in range(pieces):
            wp = wp.at[:fan_in, k * g_pad:k * g_pad + groups].set(w[:, k::pieces])
            bp = bp.at[0, k * g_pad:k * g_pad + groups].set(b[k::pieces])
        return wp, bp

    wx, bx = pack(w_x, b_x, X_GROUPS, X_PIECES, XG_PAD)                     # (256,1280)
    wy, by = pack(w_y, b_y, Y_GROUPS, Y_PIECES, YG_PAD)                     # (10, 640)
    wjx, bj = pack(w_j[:X_GROUPS], b_j, J_GROUPS, J_PIECES, JG_PAD,
                   row_pad=XG_PAD)                                          # (256,1024)
    wjy, _ = pack(w_j[X_GROUPS:], b_j, J_GROUPS, J_PIECES, JG_PAD,
                  row_pad=YG_PAD)                                           # (128,1024)

    wm = jnp.zeros((1, JG_PAD), jnp.float32).at[0, :J_GROUPS].set(w_m[:, 0])  # (1,256)
    bm = b_m.reshape(1, 1)

    # bf16 for MXU weight operands (halves HBM/VMEM footprint); biases and the
    # final projection row stay f32.
    return (wx.astype(jnp.bfloat16), bx,
            wy.astype(jnp.bfloat16), by,
            wjx.astype(jnp.bfloat16), wjy.astype(jnp.bfloat16), bj,
            wm, bm)


def reference_forward(x, y, raw):
    """Pure-JAX f32 reference mirroring the torch forward exactly."""
    (w_x, b_x, w_y, b_y, w_j, b_j, w_m, b_m) = raw
    B = x.shape[0]
    hx = (x.reshape(B, N_FEATURES) @ w_x + b_x)
    hx = hx.reshape(B, X_GROUPS, X_PIECES).max(axis=2)
    hy = (y.reshape(B, N_CLASSES) @ w_y + b_y)
    hy = hy.reshape(B, Y_GROUPS, Y_PIECES).max(axis=2)
    j = jnp.concatenate([hx, hy], axis=1)
    hj = (j @ w_j + b_j).reshape(B, J_GROUPS, J_PIECES).max(axis=2)
    return jax.nn.sigmoid(hj @ w_m + b_m)


if __name__ == "__main__":
    key = jax.random.PRNGKey(0)
    k_params, k_x, k_y = jax.random.split(key, 3)

    raw = make_raw_params(k_params)
    params = pack_params(raw)

    B = 2
    x = jax.random.normal(k_x, (B, CHANNELS, IMG_SIZE, IMG_SIZE), jnp.float32)
    labels = jax.random.randint(k_y, (B,), 0, N_CLASSES)
    y = jax.nn.one_hot(labels, N_CLASSES, dtype=jnp.float32)

    prob = discriminator_forward(x, y, params)
    jax.block_until_ready(prob)

    ref = reference_forward(x, y, raw)

    assert prob.shape == (B, 1)
    assert bool(jnp.all((prob >= 0.0) & (prob <= 1.0)))
    # bf16 MXU weights vs f32 reference: generous tolerance on sigmoid output.
    max_err = float(jnp.max(jnp.abs(prob - ref)))
    assert max_err < 5e-2, max_err
    print("KERNEL_OK")
</pallas_src>

<mosaic_0001>
module attributes {stable_mosaic.version = 11 : i64} {
  func.func @_disc_kernel(%arg0: i32, %arg1: memref<8x256xbf16, #tpu.memory_space<vmem>>, %arg2: memref<8x10xbf16, #tpu.memory_space<vmem>>, %arg3: memref<256x1280xbf16, #tpu.memory_space<vmem>>, %arg4: memref<1x1280xf32, #tpu.memory_space<vmem>>, %arg5: memref<10x640xbf16, #tpu.memory_space<vmem>>, %arg6: memref<1x640xf32, #tpu.memory_space<vmem>>, %arg7: memref<256x1024xbf16, #tpu.memory_space<vmem>>, %arg8: memref<128x1024xbf16, #tpu.memory_space<vmem>>, %arg9: memref<1x1024xf32, #tpu.memory_space<vmem>>, %arg10: memref<1x256xf32, #tpu.memory_space<vmem>>, %arg11: memref<1x1xf32, #tpu.memory_space<vmem>>, %arg12: memref<8x1xf32, #tpu.memory_space<vmem>>) attributes {dimension_semantics = [#tpu.dimension_semantics<parallel>], iteration_bounds = array<i64: 1>, scalar_prefetch = 0 : i64, scratch_operands = 0 : i64, tpu.core_type = #tpu.core_type<tc>, window_params = [{transform_indices = @transform_0, window_bounds = array<i64: 8, 256>}, {transform_indices = @transform_1, window_bounds = array<i64: 8, 10>}, {pipeline_mode = #tpu.pipeline_mode<synchronous>, transform_indices = @transform_2, window_bounds = array<i64: 256, 1280>}, {pipeline_mode = #tpu.pipeline_mode<synchronous>, transform_indices = @transform_3, window_bounds = array<i64: 1, 1280>}, {pipeline_mode = #tpu.pipeline_mode<synchronous>, transform_indices = @transform_4, window_bounds = array<i64: 10, 640>}, {pipeline_mode = #tpu.pipeline_mode<synchronous>, transform_indices = @transform_5, window_bounds = array<i64: 1, 640>}, {pipeline_mode = #tpu.pipeline_mode<synchronous>, transform_indices = @transform_6, window_bounds = array<i64: 256, 1024>}, {pipeline_mode = #tpu.pipeline_mode<synchronous>, transform_indices = @transform_7, window_bounds = array<i64: 128, 1024>}, {pipeline_mode = #tpu.pipeline_mode<synchronous>, transform_indices = @transform_8, window_bounds = array<i64: 1, 1024>}, {pipeline_mode = #tpu.pipeline_mode<synchronous>, transform_indices = @transform_9, window_bounds = array<i64: 1, 256>}, {pipeline_mode = #tpu.pipeline_mode<synchronous>, transform_indices = @transform_10, window_bounds = array<i64: 1, 1>}, {transform_indices = @transform_11, window_bounds = array<i64: 8, 1>}]} {
    %c0 = arith.constant 0 : index
    %c0_0 = arith.constant 0 : index
    %0 = vector.load %arg1[%c0, %c0_0] : memref<8x256xbf16, #tpu.memory_space<vmem>>, vector<8x256xbf16>
    %c0_1 = arith.constant 0 : index
    %c0_2 = arith.constant 0 : index
    %1 = vector.load %arg2[%c0_1, %c0_2] : memref<8x10xbf16, #tpu.memory_space<vmem>>, vector<8x10xbf16>
    %c0_3 = arith.constant 0 : index
    %c0_4 = arith.constant 0 : index
    %2 = vector.load %arg3[%c0_3, %c0_4] : memref<256x1280xbf16, #tpu.memory_space<vmem>>, vector<256x1280xbf16>
    %cst = arith.constant dense<0.000000e+00> : vector<8x1280xf32>
    %3 = tpu.matmul %0, %2, %cst {dimension_numbers = #tpu.dot_dimension_numbers<[1], [0], [0], [1], [0, 0, 1, 1], [], []>} : vector<8x256xbf16>, vector<256x1280xbf16>, vector<8x1280xf32> -> vector<8x1280xf32>
    %c0_5 = arith.constant 0 : index
    %c0_6 = arith.constant 0 : index
    %4 = vector.load %arg4[%c0_5, %c0_6] : memref<1x1280xf32, #tpu.memory_space<vmem>>, vector<1x1280xf32>
    %5 = vector.broadcast %4 : vector<1x1280xf32> to vector<8x1280xf32>
    %6 = arith.addf %3, %5 : vector<8x1280xf32>
    %7 = vector.extract_strided_slice %6 {offsets = [0, 0], sizes = [8, 256], strides = [1, 1]} : vector<8x1280xf32> to vector<8x256xf32>
    %8 = vector.extract_strided_slice %6 {offsets = [0, 256], sizes = [8, 256], strides = [1, 1]} : vector<8x1280xf32> to vector<8x256xf32>
    %9 = arith.maximumf %7, %8 : vector<8x256xf32>
    %10 = vector.extract_strided_slice %6 {offsets = [0, 512], sizes = [8, 256], strides = [1, 1]} : vector<8x1280xf32> to vector<8x256xf32>
    %11 = arith.maximumf %9, %10 : vector<8x256xf32>
    %12 = vector.extract_strided_slice %6 {offsets = [0, 768], sizes = [8, 256], strides = [1, 1]} : vector<8x1280xf32> to vector<8x256xf32>
    %13 = arith.maximumf %11, %12 : vector<8x256xf32>
    %14 = vector.extract_strided_slice %6 {offsets = [0, 1024], sizes = [8, 256], strides = [1, 1]} : vector<8x1280xf32> to vector<8x256xf32>
    %15 = arith.maximumf %13, %14 : vector<8x256xf32>
    %c0_7 = arith.constant 0 : index
    %c0_8 = arith.constant 0 : index
    %16 = vector.load %arg5[%c0_7, %c0_8] : memref<10x640xbf16, #tpu.memory_space<vmem>>, vector<10x640xbf16>
    %cst_9 = arith.constant dense<0.000000e+00> : vector<8x640xf32>
    %17 = tpu.matmul %1, %16, %cst_9 {dimension_numbers = #tpu.dot_dimension_numbers<[1], [0], [0], [1], [0, 0, 1, 1], [], []>} : vector<8x10xbf16>, vector<10x640xbf16>, vector<8x640xf32> -> vector<8x640xf32>
    %c0_10 = arith.constant 0 : index
    %c0_11 = arith.constant 0 : index
    %18 = vector.load %arg6[%c0_10, %c0_11] : memref<1x640xf32, #tpu.memory_space<vmem>>, vector<1x640xf32>
    %19 = vector.broadcast %18 : vector<1x640xf32> to vector<8x640xf32>
    %20 = arith.addf %17, %19 : vector<8x640xf32>
    %21 = vector.extract_strided_slice %20 {offsets = [0, 0], sizes = [8, 128], strides = [1, 1]} : vector<8x640xf32> to vector<8x128xf32>
    %22 = vector.extract_strided_slice %20 {offsets = [0, 128], sizes = [8, 128], strides = [1, 1]} : vector<8x640xf32> to vector<8x128xf32>
    %23 = arith.maximumf %21, %22 : vector<8x128xf32>
    %24 = vector.extract_strided_slice %20 {offsets = [0, 256], sizes = [8, 128], strides = [1, 1]} : vector<8x640xf32> to vector<8x128xf32>
    %25 = arith.maximumf %23, %24 : vector<8x128xf32>
    %26 = vector.extract_strided_slice %20 {offsets = [0, 384], sizes = [8, 128], strides = [1, 1]} : vector<8x640xf32> to vector<8x128xf32>
    %27 = arith.maximumf %25, %26 : vector<8x128xf32>
    %28 = vector.extract_strided_slice %20 {offsets = [0, 512], sizes = [8, 128], strides = [1, 1]} : vector<8x640xf32> to vector<8x128xf32>
    %29 = arith.maximumf %27, %28 : vector<8x128xf32>
    %30 = arith.truncf %15 : vector<8x256xf32> to vector<8x256xbf16>
    %c0_12 = arith.constant 0 : index
    %c0_13 = arith.constant 0 : index
    %31 = vector.load %arg7[%c0_12, %c0_13] : memref<256x1024xbf16, #tpu.memory_space<vmem>>, vector<256x1024xbf16>
    %cst_14 = arith.constant dense<0.000000e+00> : vector<8x1024xf32>
    %32 = tpu.matmul %30, %31, %cst_14 {dimension_numbers = #tpu.dot_dimension_numbers<[1], [0], [0], [1], [0, 0, 1, 1], [], []>} : vector<8x256xbf16>, vector<256x1024xbf16>, vector<8x1024xf32> -> vector<8x1024xf32>
    %33 = arith.truncf %29 : vector<8x128xf32> to vector<8x128xbf16>
    %c0_15 = arith.constant 0 : index
    %c0_16 = arith.constant 0 : index
    %34 = vector.load %arg8[%c0_15, %c0_16] : memref<128x1024xbf16, #tpu.memory_space<vmem>>, vector<128x1024xbf16>
    %cst_17 = arith.constant dense<0.000000e+00> : vector<8x1024xf32>
    %35 = tpu.matmul %33, %34, %cst_17 {dimension_numbers = #tpu.dot_dimension_numbers<[1], [0], [0], [1], [0, 0, 1, 1], [], []>} : vector<8x128xbf16>, vector<128x1024xbf16>, vector<8x1024xf32> -> vector<8x1024xf32>
    %36 = arith.addf %32, %35 : vector<8x1024xf32>
    %c0_18 = arith.constant 0 : index
    %c0_19 = arith.constant 0 : index
    %37 = vector.load %arg9[%c0_18, %c0_19] : memref<1x1024xf32, #tpu.memory_space<vmem>>, vector<1x1024xf32>
    %38 = vector.broadcast %37 : vector<1x1024xf32> to vector<8x1024xf32>
    %39 = arith.addf %36, %38 : vector<8x1024xf32>
    %40 = vector.extract_strided_slice %39 {offsets = [0, 0], sizes = [8, 256], strides = [1, 1]} : vector<8x1024xf32> to vector<8x256xf32>
    %41 = vector.extract_strided_slice %39 {offsets = [0, 256], sizes = [8, 256], strides = [1, 1]} : vector<8x1024xf32> to vector<8x256xf32>
    %42 = arith.maximumf %40, %41 : vector<8x256xf32>
    %43 = vector.extract_strided_slice %39 {offsets = [0, 512], sizes = [8, 256], strides = [1, 1]} : vector<8x1024xf32> to vector<8x256xf32>
    %44 = arith.maximumf %42, %43 : vector<8x256xf32>
    %45 = vector.extract_strided_slice %39 {offsets = [0, 768], sizes = [8, 256], strides = [1, 1]} : vector<8x1024xf32> to vector<8x256xf32>
    %46 = arith.maximumf %44, %45 : vector<8x256xf32>
    %c0_20 = arith.constant 0 : index
    %c0_21 = arith.constant 0 : index
    %47 = vector.load %arg10[%c0_20, %c0_21] : memref<1x256xf32, #tpu.memory_space<vmem>>, vector<1x256xf32>
    %48 = vector.broadcast %47 : vector<1x256xf32> to vector<8x256xf32>
    %49 = arith.mulf %46, %48 : vector<8x256xf32>
    %cst_22 = arith.constant dense<0.000000e+00> : vector<8xf32>
    %50 = vector.multi_reduction <add>, %49, %cst_22 [1] : vector<8x256xf32> to vector<8xf32>
    %51 = vector.shape_cast %50 : vector<8xf32> to vector<8x1xf32>
    %c0_23 = arith.constant 0 : index
    %c0_24 = arith.constant 0 : index
    %52 = vector.load %arg11[%c0_23, %c0_24] : memref<1x1xf32, #tpu.memory_space<vmem>>, vector<1x1xf32>
    %53 = vector.broadcast %52 : vector<1x1xf32> to vector<8x1xf32>
    %54 = arith.addf %51, %53 : vector<8x1xf32>
    %55 = arith.negf %54 : vector<8x1xf32>
    %56 = math.exp %55 : vector<8x1xf32>
    %cst_25 = arith.constant 1.000000e+00 : f32
    %57 = vector.broadcast %cst_25 : f32 to vector<8x1xf32>
    %58 = arith.addf %57, %56 : vector<8x1xf32>
    %59 = arith.divf %57, %58 : vector<8x1xf32>
    %c0_26 = arith.constant 0 : index
    %c0_27 = arith.constant 0 : index
    %60 = vector.load %arg12[%c0_26, %c0_27] : memref<8x1xf32, #tpu.memory_space<vmem>>, vector<8x1xf32>
    tpu.vector_store %arg12[%c0_26, %c0_27], %59 {strides = array<i32>} : memref<8x1xf32, #tpu.memory_space<vmem>>, vector<8x1xf32>,
    return
  }
  func.func @transform_0(%arg0: i32) -> (i32, i32) {
    %c0_i32 = arith.constant 0 : i32
    %c0_i32_0 = arith.constant 0 : i32
    return %arg0, %c0_i32 : i32, i32
  }
  func.func @transform_1(%arg0: i32) -> (i32, i32) {
    %c0_i32 = arith.constant 0 : i32
    %c0_i32_0 = arith.constant 0 : i32
    return %arg0, %c0_i32 : i32, i32
  }
  func.func @transform_2(%arg0: i32) -> (i32, i32) {
    %c0_i32 = arith.constant 0 : i32
    %c0_i32_0 = arith.constant 0 : i32
    %c0_i32_1 = arith.constant 0 : i32
    return %c0_i32, %c0_i32_0 : i32, i32
  }
  func.func @transform_3(%arg0: i32) -> (i32, i32) {
    %c0_i32 = arith.constant 0 : i32
    %c0_i32_0 = arith.constant 0 : i32
    %c0_i32_1 = arith.constant 0 : i32
    return %c0_i32, %c0_i32_0 : i32, i32
  }
  func.func @transform_4(%arg0: i32) -> (i32, i32) {
    %c0_i32 = arith.constant 0 : i32
    %c0_i32_0 = arith.constant 0 : i32
    %c0_i32_1 = arith.constant 0 : i32
    return %c0_i32, %c0_i32_0 : i32, i32
  }
  func.func @transform_5(%arg0: i32) -> (i32, i32) {
    %c0_i32 = arith.constant 0 : i32
    %c0_i32_0 = arith.constant 0 : i32
    %c0_i32_1 = arith.constant 0 : i32
    return %c0_i32, %c0_i32_0 : i32, i32
  }
  func.func @transform_6(%arg0: i32) -> (i32, i32) {
    %c0_i32 = arith.constant 0 : i32
    %c0_i32_0 = arith.constant 0 : i32
    %c0_i32_1 = arith.constant 0 : i32
    return %c0_i32, %c0_i32_0 : i32, i32
  }
  func.func @transform_7(%arg0: i32) -> (i32, i32) {
    %c0_i32 = arith.constant 0 : i32
    %c0_i32_0 = arith.constant 0 : i32
    %c0_i32_1 = arith.constant 0 : i32
    return %c0_i32, %c0_i32_0 : i32, i32
  }
  func.func @transform_8(%arg0: i32) -> (i32, i32) {
    %c0_i32 = arith.constant 0 : i32
    %c0_i32_0 = arith.constant 0 : i32
    %c0_i32_1 = arith.constant 0 : i32
    return %c0_i32, %c0_i32_0 : i32, i32
  }
  func.func @transform_9(%arg0: i32) -> (i32, i32) {
    %c0_i32 = arith.constant 0 : i32
    %c0_i32_0 = arith.constant 0 : i32
    %c0_i32_1 = arith.constant 0 : i32
    return %c0_i32, %c0_i32_0 : i32, i32
  }
  func.func @transform_10(%arg0: i32) -> (i32, i32) {
    %c0_i32 = arith.constant 0 : i32
    %c0_i32_0 = arith.constant 0 : i32
    %c0_i32_1 = arith.constant 0 : i32
    return %c0_i32, %c0_i32_0 : i32, i32
  }
  func.func @transform_11(%arg0: i32) -> (i32, i32) {
    %c0_i32 = arith.constant 0 : i32
    %c0_i32_0 = arith.constant 0 : i32
    return %arg0, %c0_i32 : i32, i32
  }
}

</mosaic_0001>

<llo_original>
// kernel: discriminator_forward.1
$region0: #{discriminator_forward.1}
  #allocation0 [shape = 'u32[]', space=smem, size = 0x4, offset = 0x4, fixed_abs, tag = 'smem constant byte address 0x4 - core index']
  #allocation1 [shape = 'u32[72,128]{1,0:T(1,128)}', space=vmem, size = 0x9000, scoped, tag = 'internal scratch']
  #allocation2 [shape = 'f32[1,1]{1,0:T(1,128)S(1)}', space=vmem, size = 0x200, scoped, tag = 'scoped memory for discriminator_forward.1']
  %s0 = inlined_call_operand.vmem [shape: bf16[8,256], index: 0, kind: input, shape index: {}]
  %s1 = inlined_call_operand.vmem [shape: bf16[8,10], index: 1, kind: input, shape index: {}]
  %s2 = inlined_call_operand.hbm [shape: bf16[256,1280], index: 2, kind: input, shape index: {}]
  %s3 = inlined_call_operand.vmem [shape: f32[1,1280], index: 3, kind: input, shape index: {}]
  %s4 = inlined_call_operand.vmem [shape: bf16[10,640], index: 4, kind: input, shape index: {}]
  %s5 = inlined_call_operand.vmem [shape: f32[1,640], index: 5, kind: input, shape index: {}]
  %s6 = inlined_call_operand.hbm [shape: bf16[256,1024], index: 6, kind: input, shape index: {}]
  %s7 = inlined_call_operand.hbm [shape: bf16[128,1024], index: 7, kind: input, shape index: {}]
  %s8 = inlined_call_operand.vmem [shape: f32[1,1024], index: 8, kind: input, shape index: {}]
  %s9 = inlined_call_operand.vmem [shape: f32[1,256], index: 9, kind: input, shape index: {}]
  %s10 = inlined_call_operand.<no memory space> [shape: f32[1,1], index: 10, kind: input, shape index: {}]
  %s11 = inlined_call_operand.vmem [shape: f32[8,1], index: 11, kind: output, shape index: {}]
  %s12 = sld [smem:[#allocation0]]
  $region66: #{discriminator_forward.1} parent=0
    _
  %s14 = ssub.s32 1, %s12
  %s15 = scalar_select 0, %s14, %s12
  %v16 = vstv %s10
  %17 = vst [vmem:[#allocation2] sm:$0x1] %v16
  $region1: #{discriminator_forward.1} parent=0
    #allocation3 [shape = 'u8[655360]{0}', space=vmem, size = 0xa0000, scoped, tag = 'input window, operand 2, single buffered']
    #allocation4 [shape = 's32[1]{0}', space=sflag, size = 0x4, scoped, tag = 'scoped memory for discriminator_forward.1']
    #allocation5 [shape = 'u8[524288]{0}', space=vmem, size = 0x80000, scoped, tag = 'input window, operand 6, single buffered']
    #allocation6 [shape = 's32[1]{0}', space=sflag, size = 0x4, scoped, tag = 'scoped memory for discriminator_forward.1']
    #allocation7 [shape = 'u8[262144]{0}', space=vmem, size = 0x40000, scoped, tag = 'input window, operand 7, single buffered']
    %18 = vsyncpa [#allocation4], 0
    %19 = vsyncpa [#allocation6], 0
    // Predicated region
    $region2: #{discriminator_forward.1} parent=1 // pred_check
      _
    $region3: #{discriminator_forward.1} parent=1 // pred_check_branch
      %21 = sbr.rel (0) target = $region5
    $region4: #{discriminator_forward.1} parent=1 // pred_region
      _
    $region5: #{discriminator_forward.1} parent=1 // pred_fallthru
      _
    // Predicated region
    $region6: #{discriminator_forward.1} parent=1 // pred_check
      _
    $region7: #{discriminator_forward.1} parent=1 // pred_check_branch
      %23 = sbr.rel (0) target = $region9
    $region8: #{discriminator_forward.1} parent=1 // pred_region
      _
    $region9: #{discriminator_forward.1} parent=1 // pred_fallthru
      _
    // Predicated region
    $region10: #{discriminator_forward.1} parent=1 // pred_check
      _
    $region11: #{discriminator_forward.1} parent=1 // pred_check_branch
      %25 = sbr.rel (0) target = $region13
    $region12: #{discriminator_forward.1} parent=1 // pred_region
      %27 = vsyncadd [#allocation4], 0
      %s28 = sshll.u32 %s2, 4
      %s29 = int_to_ptr.hbm [resolvable:$true] %s28
      %s30 = sshll.u32 [#allocation3], 4
      %s31 = int_to_ptr.vmem [resolvable:$true] %s30
      %36 = dma.hbm_to_vmem [thread:$0]  %s29, 20480, %s31, [#allocation4], 640, 640, 40
    $region13: #{discriminator_forward.1} parent=1 // pred_fallthru
      _
    // Predicated region
    $region14: #{discriminator_forward.1} parent=1 // pred_check
      _
    $region15: #{discriminator_forward.1} parent=1 // pred_check_branch
      %38 = sbr.rel (0) target = $region17
    $region16: #{discriminator_forward.1} parent=1 // pred_region
      _
    $region17: #{discriminator_forward.1} parent=1 // pred_fallthru
      _
    // Predicated region
    $region18: #{discriminator_forward.1} parent=1 // pred_check
      _
    $region19: #{discriminator_forward.1} parent=1 // pred_check_branch
      %40 = sbr.rel (0) target = $region21
    $region20: #{discriminator_forward.1} parent=1 // pred_region
      _
    $region21: #{discriminator_forward.1} parent=1 // pred_fallthru
      _
    // Predicated region
    $region22: #{discriminator_forward.1} parent=1 // pred_check
      _
    $region23: #{discriminator_forward.1} parent=1 // pred_check_branch
      %42 = sbr.rel (0) target = $region25
    $region24: #{discriminator_forward.1} parent=1 // pred_region
      _
    $region25: #{discriminator_forward.1} parent=1 // pred_fallthru
      _
    // Predicated region
    $region26: #{discriminator_forward.1} parent=1 // pred_check
      _
    $region27: #{discriminator_forward.1} parent=1 // pred_check_branch
      %44 = sbr.rel (0) target = $region29
    $region28: #{discriminator_forward.1} parent=1 // pred_region
      %46 = vsyncadd [#allocation6], 0
      %s47 = sshll.u32 %s6, 4
      %s48 = int_to_ptr.hbm [resolvable:$true] %s47
      %s49 = sshll.u32 [#allocation5], 4
      %s50 = int_to_ptr.vmem [resolvable:$true] %s49
      %55 = dma.hbm_to_vmem [thread:$0]  %s48, 16384, %s50, [#allocation6], 512, 512, 32
    $region29: #{discriminator_forward.1} parent=1 // pred_fallthru
      _
    // Predicated region
    $region30: #{discriminator_forward.1} parent=1 // pred_check
      _
    $region31: #{discriminator_forward.1} parent=1 // pred_check_branch
      %57 = sbr.rel (0) target = $region33
    $region32: #{discriminator_forward.1} parent=1 // pred_region
      %59 = vsyncadd [#allocation6], 0
      %s60 = sshll.u32 %s7, 4
      %s61 = int_to_ptr.hbm [resolvable:$true] %s60
      %s62 = sshll.u32 [#allocation7], 4
      %s63 = int_to_ptr.vmem [resolvable:$true] %s62
      %68 = dma.hbm_to_vmem [thread:$0]  %s61, 8192, %s63, [#allocation6], 512, 512, 32
    $region33: #{discriminator_forward.1} parent=1 // pred_fallthru
      _
    // Predicated region
    $region34: #{discriminator_forward.1} parent=1 // pred_check
      _
    $region35: #{discriminator_forward.1} parent=1 // pred_check_branch
      %70 = sbr.rel (0) target = $region37
    $region36: #{discriminator_forward.1} parent=1 // pred_region
      _
    $region37: #{discriminator_forward.1} parent=1 // pred_fallthru
      _
    // Predicated region
    $region38: #{discriminator_forward.1} parent=1 // pred_check
      _
    $region39: #{discriminator_forward.1} parent=1 // pred_check_branch
      %72 = sbr.rel (0) target = $region41
    $region40: #{discriminator_forward.1} parent=1 // pred_region
      _
    $region41: #{discriminator_forward.1} parent=1 // pred_fallthru
      _
    // Predicated region
    $region42: #{discriminator_forward.1} parent=1 // pred_check
      _
    $region43: #{discriminator_forward.1} parent=1 // pred_check_branch
      %74 = sbr.rel (0) target = $region45
    $region44: #{discriminator_forward.1} parent=1 // pred_region
      _
    $region45: #{discriminator_forward.1} parent=1 // pred_fallthru
      _
    // Predicated region
    $region46: #{discriminator_forward.1} parent=1 // pred_check
      _
    $region47: #{discriminator_forward.1} parent=1 // pred_check_branch
      %76 = sbr.rel (0) target = $region49
    $region48: #{discriminator_forward.1} parent=1 // pred_region
      %78 = dma.done [#allocation4], 20480
    $region49: #{discriminator_forward.1} parent=1 // pred_fallthru
      _
    // Predicated region
    $region50: #{discriminator_forward.1} parent=1 // pred_check
      _
    $region51: #{discriminator_forward.1} parent=1 // pred_check_branch
      %80 = sbr.rel (0) target = $region53
    $region52: #{discriminator_forward.1} parent=1 // pred_region
      %82 = dma.done [#allocation6], 16384
    $region53: #{discriminator_forward.1} parent=1 // pred_fallthru
      _
    // Predicated region
    $region54: #{discriminator_forward.1} parent=1 // pred_check
      _
    $region55: #{discriminator_forward.1} parent=1 // pred_check_branch
      %84 = sbr.rel (0) target = $region57
    $region56: #{discriminator_forward.1} parent=1 // pred_region
      %86 = dma.done [#allocation6], 8192
    $region57: #{discriminator_forward.1} parent=1 // pred_fallthru
      _
    %v88 = vld [vmem:[%s0] sm:$0xff]
    %v89 = vld [vmem:[%s1] sm:$0xf]
    %v90 = vld [vmem:[#allocation3] sm:$0xff]
    %v91 = vld [vmem:[#allocation3 + $0x8] sm:$0xff]
    %v92 = vld [vmem:[#allocation3 + $0x10] sm:$0xff]
    %v93 = vld [vmem:[#allocation3 + $0x18] sm:$0xff]
    %v94 = vld [vmem:[#allocation3 + $0x20] sm:$0xff]
    %v95 = vld [vmem:[#allocation3 + $0x28] sm:$0xff]
    %v96 = vld [vmem:[#allocation3 + $0x30] sm:$0xff]
    %v97 = vld [vmem:[#allocation3 + $0x38] sm:$0xff]
    %v98 = vld [vmem:[#allocation3 + $0x40] sm:$0xff]
    %v99 = vld [vmem:[#allocation3 + $0x48] sm:$0xff]
    %v100 = vld [vmem:[#allocation3 + $0x50] sm:$0xff]
    %v101 = vld [vmem:[#allocation3 + $0x58] sm:$0xff]
    %v102 = vld [vmem:[#allocation3 + $0x60] sm:$0xff]
    %v103 = vld [vmem:[#allocation3 + $0x68] sm:$0xff]
    %v104 = vld [vmem:[#allocation3 + $0x70] sm:$0xff]
    %v105 = vld [vmem:[#allocation3 + $0x78] sm:$0xff]
    %v106 = vld [vmem:[#allocation3 + $0x80] sm:$0xff]
    %v107 = vld [vmem:[#allocation3 + $0x88] sm:$0xff]
    %v108 = vld [vmem:[#allocation3 + $0x90] sm:$0xff]
    %v109 = vld [vmem:[#allocation3 + $0x98] sm:$0xff]
    %v110 = vld [vmem:[#allocation3 + $0xa0] sm:$0xff]
    %v111 = vld [vmem:[#allocation3 + $0xa8] sm:$0xff]
    %v112 = vld [vmem:[#allocation3 + $0xb0] sm:$0xff]
    %v113 = vld [vmem:[#allocation3 + $0xb8] sm:$0xff]
    %v114 = vld [vmem:[#allocation3 + $0xc0] sm:$0xff]
    %v115 = vld [vmem:[#allocation3 + $0xc8] sm:$0xff]
    %v116 = vld [vmem:[#allocation3 + $0xd0] sm:$0xff]
    %v117 = vld [vmem:[#allocation3 + $0xd8] sm:$0xff]
    %v118 = vld [vmem:[#allocation3 + $0xe0] sm:$0xff]
    %v119 = vld [vmem:[#allocation3 + $0xe8] sm:$0xff]
    %v120 = vld [vmem:[#allocation3 + $0xf0] sm:$0xff]
    %v121 = vld [vmem:[#allocation3 + $0xf8] sm:$0xff]
    %v122 = vld [vmem:[#allocation3 + $0x100] sm:$0xff]
    %v123 = vld [vmem:[#allocation3 + $0x108] sm:$0xff]
    %v124 = vld [vmem:[#allocation3 + $0x110] sm:$0xff]
    %v125 = vld [vmem:[#allocation3 + $0x118] sm:$0xff]
    %v126 = vld [vmem:[#allocation3 + $0x120] sm:$0xff]
    %v127 = vld [vmem:[#allocation3 + $0x128] sm:$0xff]
    %v128 = vld [vmem:[#allocation3 + $0x130] sm:$0xff]
    %v129 = vld [vmem:[#allocation3 + $0x138] sm:$0xff]
    %v130 = vld [vmem:[#allocation3 + $0x140] sm:$0xff]
    %v131 = vld [vmem:[#allocation3 + $0x148] sm:$0xff]
    %v132 = vld [vmem:[#allocation3 + $0x150] sm:$0xff]
    %v133 = vld [vmem:[#allocation3 + $0x158] sm:$0xff]
    %v134 = vld [vmem:[#allocation3 + $0x160] sm:$0xff]
    %v135 = vld [vmem:[#allocation3 + $0x168] sm:$0xff]
    %v136 = vld [vmem:[#allocation3 + $0x170] sm:$0xff]
    %v137 = vld [vmem:[#allocation3 + $0x178] sm:$0xff]
    %v138 = vld [vmem:[#allocation3 + $0x180] sm:$0xff]
    %v139 = vld [vmem:[#allocation3 + $0x188] sm:$0xff]
    %v140 = vld [vmem:[#allocation3 + $0x190] sm:$0xff]
    %v141 = vld [vmem:[#allocation3 + $0x198] sm:$0xff]
    %v142 = vld [vmem:[#allocation3 + $0x1a0] sm:$0xff]
    %v143 = vld [vmem:[#allocation3 + $0x1a8] sm:$0xff]
    %v144 = vld [vmem:[#allocation3 + $0x1b0] sm:$0xff]
    %v145 = vld [vmem:[#allocation3 + $0x1b8] sm:$0xff]
    %v146 = vld [vmem:[#allocation3 + $0x1c0] sm:$0xff]
    %v147 = vld [vmem:[#allocation3 + $0x1c8] sm:$0xff]
    %v148 = vld [vmem:[#allocation3 + $0x1d0] sm:$0xff]
    %v149 = vld [vmem:[#allocation3 + $0x1d8] sm:$0xff]
    %v150 = vld [vmem:[#allocation3 + $0x1e0] sm:$0xff]
    %v151 = vld [vmem:[#allocation3 + $0x1e8] sm:$0xff]
    %v152 = vld [vmem:[#allocation3 + $0x1f0] sm:$0xff]
    %v153 = vld [vmem:[#allocation3 + $0x1f8] sm:$0xff]
    %v154 = vld [vmem:[#allocation3 + $0x200] sm:$0xff]
    %v155 = vld [vmem:[#allocation3 + $0x208] sm:$0xff]
    %v156 = vld [vmem:[#allocation3 + $0x210] sm:$0xff]
    %v157 = vld [vmem:[#allocation3 + $0x218] sm:$0xff]
    %v158 = vld [vmem:[#allocation3 + $0x220] sm:$0xff]
    %v159 = vld [vmem:[#allocation3 + $0x228] sm:$0xff]
    %v160 = vld [vmem:[#allocation3 + $0x230] sm:$0xff]
    %v161 = vld [vmem:[#allocation3 + $0x238] sm:$0xff]
    %v162 = vld [vmem:[#allocation3 + $0x240] sm:$0xff]
    %v163 = vld [vmem:[#allocation3 + $0x248] sm:$0xff]
    %v164 = vld [vmem:[#allocation3 + $0x250] sm:$0xff]
    %v165 = vld [vmem:[#allocation3 + $0x258] sm:$0xff]
    %v166 = vld [vmem:[#allocation3 + $0x260] sm:$0xff]
    %v167 = vld [vmem:[#allocation3 + $0x268] sm:$0xff]
    %v168 = vld [vmem:[#allocation3 + $0x270] sm:$0xff]
    %v169 = vld [vmem:[#allocation3 + $0x278] sm:$0xff]
    %v170 = vld [vmem:[#allocation3 + $0x280] sm:$0xff]
    %v171 = vld [vmem:[#allocation3 + $0x288] sm:$0xff]
    %v172 = vld [vmem:[#allocation3 + $0x290] sm:$0xff]
    %v173 = vld [vmem:[#allocation3 + $0x298] sm:$0xff]
    %v174 = vld [vmem:[#allocation3 + $0x2a0] sm:$0xff]
    %v175 = vld [vmem:[#allocation3 + $0x2a8] sm:$0xff]
    %v176 = vld [vmem:[#allocation3 + $0x2b0] sm:$0xff]
    %v177 = vld [vmem:[#allocation3 + $0x2b8] sm:$0xff]
    %v178 = vld [vmem:[#allocation3 + $0x2c0] sm:$0xff]
    %v179 = vld [vmem:[#allocation3 + $0x2c8] sm:$0xff]
    %v180 = vld [vmem:[#allocation3 + $0x2d0] sm:$0xff]
    %v181 = vld [vmem:[#allocation3 + $0x2d8] sm:$0xff]
    %v182 = vld [vmem:[#allocation3 + $0x2e0] sm:$0xff]
    %v183 = vld [vmem:[#allocation3 + $0x2e8] sm:$0xff]
    %v184 = vld [vmem:[#allocation3 + $0x2f0] sm:$0xff]
    %v185 = vld [vmem:[#allocation3 + $0x2f8] sm:$0xff]
    %v186 = vld [vmem:[#allocation3 + $0x300] sm:$0xff]
    %v187 = vld [vmem:[#allocation3 + $0x308] sm:$0xff]
    %v188 = vld [vmem:[#allocation3 + $0x310] sm:$0xff]
    %v189 = vld [vmem:[#allocation3 + $0x318] sm:$0xff]
    %v190 = vld [vmem:[#allocation3 + $0x320] sm:$0xff]
    %v191 = vld [vmem:[#allocation3 + $0x328] sm:$0xff]
    %v192 = vld [vmem:[#allocation3 + $0x330] sm:$0xff]
    %v193 = vld [vmem:[#allocation3 + $0x338] sm:$0xff]
    %v194 = vld [vmem:[#allocation3 + $0x340] sm:$0xff]
    %v195 = vld [vmem:[#allocation3 + $0x348] sm:$0xff]
    %v196 = vld [vmem:[#allocation3 + $0x350] sm:$0xff]
    %v197 = vld [vmem:[#allocation3 + $0x358] sm:$0xff]
    %v198 = vld [vmem:[#allocation3 + $0x360] sm:$0xff]
    %v199 = vld [vmem:[#allocation3 + $0x368] sm:$0xff]
    %v200 = vld [vmem:[#allocation3 + $0x370] sm:$0xff]
    %v201 = vld [vmem:[#allocation3 + $0x378] sm:$0xff]
    %v202 = vld [vmem:[#allocation3 + $0x380] sm:$0xff]
    %v203 = vld [vmem:[#allocation3 + $0x388] sm:$0xff]
    %v204 = vld [vmem:[#allocation3 + $0x390] sm:$0xff]
    %v205 = vld [vmem:[#allocation3 + $0x398] sm:$0xff]
    %v206 = vld [vmem:[#allocation3 + $0x3a0] sm:$0xff]
    %v207 = vld [vmem:[#allocation3 + $0x3a8] sm:$0xff]
    %v208 = vld [vmem:[#allocation3 + $0x3b0] sm:$0xff]
    %v209 = vld [vmem:[#allocation3 + $0x3b8] sm:$0xff]
    %v210 = vld [vmem:[#allocation3 + $0x3c0] sm:$0xff]
    %v211 = vld [vmem:[#allocation3 + $0x3c8] sm:$0xff]
    %v212 = vld [vmem:[#allocation3 + $0x3d0] sm:$0xff]
    %v213 = vld [vmem:[#allocation3 + $0x3d8] sm:$0xff]
    %v214 = vld [vmem:[#allocation3 + $0x3e0] sm:$0xff]
    %v215 = vld [vmem:[#allocation3 + $0x3e8] sm:$0xff]
    %v216 = vld [vmem:[#allocation3 + $0x3f0] sm:$0xff]
    %v217 = vld [vmem:[#allocation3 + $0x3f8] sm:$0xff]
    %v218 = vld [vmem:[#allocation3 + $0x400] sm:$0xff]
    %v219 = vld [vmem:[#allocation3 + $0x408] sm:$0xff]
    %v220 = vld [vmem:[#allocation3 + $0x410] sm:$0xff]
    %v221 = vld [vmem:[#allocation3 + $0x418] sm:$0xff]
    %v222 = vld [vmem:[#allocation3 + $0x420] sm:$0xff]
    %v223 = vld [vmem:[#allocation3 + $0x428] sm:$0xff]
    %v224 = vld [vmem:[#allocation3 + $0x430] sm:$0xff]
    %v225 = vld [vmem:[#allocation3 + $0x438] sm:$0xff]
    %v226 = vld [vmem:[#allocation3 + $0x440] sm:$0xff]
    %v227 = vld [vmem:[#allocation3 + $0x448] sm:$0xff]
    %v228 = vld [vmem:[#allocation3 + $0x450] sm:$0xff]
    %v229 = vld [vmem:[#allocation3 + $0x458] sm:$0xff]
    %v230 = vld [vmem:[#allocation3 + $0x460] sm:$0xff]
    %v231 = vld [vmem:[#allocation3 + $0x468] sm:$0xff]
    %v232 = vld [vmem:[#allocation3 + $0x470] sm:$0xff]
    %v233 = vld [vmem:[#allocation3 + $0x478] sm:$0xff]
    %v234 = vld [vmem:[#allocation3 + $0x480] sm:$0xff]
    %v235 = vld [vmem:[#allocation3 + $0x488] sm:$0xff]
    %v236 = vld [vmem:[#allocation3 + $0x490] sm:$0xff]
    %v237 = vld [vmem:[#allocation3 + $0x498] sm:$0xff]
    %v238 = vld [vmem:[#allocation3 + $0x4a0] sm:$0xff]
    %v239 = vld [vmem:[#allocation3 + $0x4a8] sm:$0xff]
    %v240 = vld [vmem:[#allocation3 + $0x4b0] sm:$0xff]
    %v241 = vld [vmem:[#allocation3 + $0x4b8] sm:$0xff]
    %v242 = vld [vmem:[#allocation3 + $0x4c0] sm:$0xff]
    %v243 = vld [vmem:[#allocation3 + $0x4c8] sm:$0xff]
    %v244 = vld [vmem:[#allocation3 + $0x4d0] sm:$0xff]
    %v245 = vld [vmem:[#allocation3 + $0x4d8] sm:$0xff]
    %v246 = vld [vmem:[#allocation3 + $0x4e0] sm:$0xff]
    %v247 = vld [vmem:[#allocation3 + $0x4e8] sm:$0xff]
    %v248 = vld [vmem:[#allocation3 + $0x4f0] sm:$0xff]
    %v249 = vld [vmem:[#allocation3 + $0x4f8] sm:$0xff]
    %v250 = vld [vmem:[%s3] sm:$0xff]
    %v251 = vld [vmem:[%s3 + $0x8] sm:$0x3]
    %v254 = vperm.slane %v250, 0
    %v255 = vperm.slane %v250, 1
    %v256 = vperm.slane %v250, 2
    %v257 = vperm.slane %v250, 3
    %v258 = vperm.slane %v250, 4
    %v259 = vperm.slane %v250, 5
    %v260 = vperm.slane %v250, 6
    %v261 = vperm.slane %v250, 7
    %v262 = vperm.slane %v251, 0
    %v263 = vperm.slane %v251, 1
    %v275 = vunpack.c.l.b16 %v88
    %v276 = vunpack.c.h.b16 %v88
    %v277 = vpack.c.b16 %v275, %v275
    %v278 = vpack.c.b16 %v276, %v276
    %v441 = vunpack.c.l.b16 %v90
    %v442 = vunpack.c.h.b16 %v90
    %v443 = vunpack.c.l.b16 %v91
    %v444 = vunpack.c.h.b16 %v91
    %v445 = vunpack.c.l.b16 %v92
    %v446 = vunpack.c.h.b16 %v92
    %v447 = vunpack.c.l.b16 %v93
    %v448 = vunpack.c.h.b16 %v93
    %v449 = vunpack.c.l.b16 %v94
    %v450 = vunpack.c.h.b16 %v94
    %v451 = vunpack.c.l.b16 %v95
    %v452 = vunpack.c.h.b16 %v95
    %v453 = vunpack.c.l.b16 %v96
    %v454 = vunpack.c.h.b16 %v96
    %v455 = vunpack.c.l.b16 %v97
    %v456 = vunpack.c.h.b16 %v97
    %v457 = vunpack.c.l.b16 %v98
    %v458 = vunpack.c.h.b16 %v98
    %v459 = vunpack.c.l.b16 %v99
    %v460 = vunpack.c.h.b16 %v99
    %v461 = vunpack.c.l.b16 %v100
    %v462 = vunpack.c.h.b16 %v100
    %v463 = vunpack.c.l.b16 %v101
    %v464 = vunpack.c.h.b16 %v101
    %v465 = vunpack.c.l.b16 %v102
    %v466 = vunpack.c.h.b16 %v102
    %v467 = vunpack.c.l.b16 %v103
    %v468 = vunpack.c.h.b16 %v103
    %v469 = vunpack.c.l.b16 %v104
    %v470 = vunpack.c.h.b16 %v104
    %v471 = vunpack.c.l.b16 %v105
    %v472 = vunpack.c.h.b16 %v105
    %v473 = vunpack.c.l.b16 %v106
    %v474 = vunpack.c.h.b16 %v106
    %v475 = vunpack.c.l.b16 %v107
    %v476 = vunpack.c.h.b16 %v107
    %v477 = vunpack.c.l.b16 %v108
    %v478 = vunpack.c.h.b16 %v108
    %v479 = vunpack.c.l.b16 %v109
    %v480 = vunpack.c.h.b16 %v109
    %v481 = vunpack.c.l.b16 %v110
    %v482 = vunpack.c.h.b16 %v110
    %v483 = vunpack.c.l.b16 %v111
    %v484 = vunpack.c.h.b16 %v111
    %v485 = vunpack.c.l.b16 %v112
    %v486 = vunpack.c.h.b16 %v112
    %v487 = vunpack.c.l.b16 %v113
    %v488 = vunpack.c.h.b16 %v113
    %v489 = vunpack.c.l.b16 %v114
    %v490 = vunpack.c.h.b16 %v114
    %v491 = vunpack.c.l.b16 %v115
    %v492 = vunpack.c.h.b16 %v115
    %v493 = vunpack.c.l.b16 %v116
    %v494 = vunpack.c.h.b16 %v116
    %v495 = vunpack.c.l.b16 %v117
    %v496 = vunpack.c.h.b16 %v117
    %v497 = vunpack.c.l.b16 %v118
    %v498 = vunpack.c.h.b16 %v118
    %v499 = vunpack.c.l.b16 %v119
    %v500 = vunpack.c.h.b16 %v119
    %v501 = vunpack.c.l.b16 %v120
    %v502 = vunpack.c.h.b16 %v120
    %v503 = vunpack.c.l.b16 %v121
    %v504 = vunpack.c.h.b16 %v121
    %v505 = vunpack.c.l.b16 %v122
    %v506 = vunpack.c.h.b16 %v122
    %v507 = vunpack.c.l.b16 %v123
    %v508 = vunpack.c.h.b16 %v123
    %v509 = vunpack.c.l.b16 %v124
    %v510 = vunpack.c.h.b16 %v124
    %v511 = vunpack.c.l.b16 %v125
    %v512 = vunpack.c.h.b16 %v125
    %v513 = vunpack.c.l.b16 %v126
    %v514 = vunpack.c.h.b16 %v126
    %v515 = vunpack.c.l.b16 %v127
    %v516 = vunpack.c.h.b16 %v127
    %v517 = vunpack.c.l.b16 %v128
    %v518 = vunpack.c.h.b16 %v128
    %v519 = vunpack.c.l.b16 %v129
    %v520 = vunpack.c.h.b16 %v129
    %v521 = vunpack.c.l.b16 %v130
    %v522 = vunpack.c.h.b16 %v130
    %v523 = vunpack.c.l.b16 %v131
    %v524 = vunpack.c.h.b16 %v131
    %v525 = vunpack.c.l.b16 %v132
    %v526 = vunpack.c.h.b16 %v132
    %v527 = vunpack.c.l.b16 %v133
    %v528 = vunpack.c.h.b16 %v133
    %v529 = vunpack.c.l.b16 %v134
    %v530 = vunpack.c.h.b16 %v134
    %v531 = vunpack.c.l.b16 %v135
    %v532 = vunpack.c.h.b16 %v135
    %v533 = vunpack.c.l.b16 %v136
    %v534 = vunpack.c.h.b16 %v136
    %v535 = vunpack.c.l.b16 %v137
    %v536 = vunpack.c.h.b16 %v137
    %v537 = vunpack.c.l.b16 %v138
    %v538 = vunpack.c.h.b16 %v138
    %v539 = vunpack.c.l.b16 %v139
    %v540 = vunpack.c.h.b16 %v139
    %v541 = vunpack.c.l.b16 %v140
    %v542 = vunpack.c.h.b16 %v140
    %v543 = vunpack.c.l.b16 %v141
    %v544 = vunpack.c.h.b16 %v141
    %v545 = vunpack.c.l.b16 %v142
    %v546 = vunpack.c.h.b16 %v142
    %v547 = vunpack.c.l.b16 %v143
    %v548 = vunpack.c.h.b16 %v143
    %v549 = vunpack.c.l.b16 %v144
    %v550 = vunpack.c.h.b16 %v144
    %v551 = vunpack.c.l.b16 %v145
    %v552 = vunpack.c.h.b16 %v145
    %v553 = vunpack.c.l.b16 %v146
    %v554 = vunpack.c.h.b16 %v146
    %v555 = vunpack.c.l.b16 %v147
    %v556 = vunpack.c.h.b16 %v147
    %v557 = vunpack.c.l.b16 %v148
    %v558 = vunpack.c.h.b16 %v148
    %v559 = vunpack.c.l.b16 %v149
    %v560 = vunpack.c.h.b16 %v149
    %v561 = vunpack.c.l.b16 %v150
    %v562 = vunpack.c.h.b16 %v150
    %v563 = vunpack.c.l.b16 %v151
    %v564 = vunpack.c.h.b16 %v151
    %v565 = vunpack.c.l.b16 %v152
    %v566 = vunpack.c.h.b16 %v152
    %v567 = vunpack.c.l.b16 %v153
    %v568 = vunpack.c.h.b16 %v153
    %v569 = vunpack.c.l.b16 %v154
    %v570 = vunpack.c.h.b16 %v154
    %v571 = vunpack.c.l.b16 %v155
    %v572 = vunpack.c.h.b16 %v155
    %v573 = vunpack.c.l.b16 %v156
    %v574 = vunpack.c.h.b16 %v156
    %v575 = vunpack.c.l.b16 %v157
    %v576 = vunpack.c.h.b16 %v157
    %v577 = vunpack.c.l.b16 %v158
    %v578 = vunpack.c.h.b16 %v158
    %v579 = vunpack.c.l.b16 %v159
    %v580 = vunpack.c.h.b16 %v159
    %v581 = vunpack.c.l.b16 %v160
    %v582 = vunpack.c.h.b16 %v160
    %v583 = vunpack.c.l.b16 %v161
    %v584 = vunpack.c.h.b16 %v161
    %v585 = vunpack.c.l.b16 %v162
    %v586 = vunpack.c.h.b16 %v162
    %v587 = vunpack.c.l.b16 %v163
    %v588 = vunpack.c.h.b16 %v163
    %v589 = vunpack.c.l.b16 %v164
    %v590 = vunpack.c.h.b16 %v164
    %v591 = vunpack.c.l.b16 %v165
    %v592 = vunpack.c.h.b16 %v165
    %v593 = vunpack.c.l.b16 %v166
    %v594 = vunpack.c.h.b16 %v166
    %v595 = vunpack.c.l.b16 %v167
    %v596 = vunpack.c.h.b16 %v167
    %v597 = vunpack.c.l.b16 %v168
    %v598 = vunpack.c.h.b16 %v168
    %v599 = vunpack.c.l.b16 %v169
    %v600 = vunpack.c.h.b16 %v169
    %v601 = vunpack.c.l.b16 %v170
    %v602 = vunpack.c.h.b16 %v170
    %v603 = vunpack.c.l.b16 %v171
    %v604 = vunpack.c.h.b16 %v171
    %v605 = vunpack.c.l.b16 %v172
    %v606 = vunpack.c.h.b16 %v172
    %v607 = vunpack.c.l.b16 %v173
    %v608 = vunpack.c.h.b16 %v173
    %v609 = vunpack.c.l.b16 %v174
    %v610 = vunpack.c.h.b16 %v174
    %v611 = vunpack.c.l.b16 %v175
    %v612 = vunpack.c.h.b16 %v175
    %v613 = vunpack.c.l.b16 %v176
    %v614 = vunpack.c.h.b16 %v176
    %v615 = vunpack.c.l.b16 %v177
    %v616 = vunpack.c.h.b16 %v177
    %v617 = vunpack.c.l.b16 %v178
    %v618 = vunpack.c.h.b16 %v178
    %v619 = vunpack.c.l.b16 %v179
    %v620 = vunpack.c.h.b16 %v179
    %v621 = vunpack.c.l.b16 %v180
    %v622 = vunpack.c.h.b16 %v180
    %v623 = vunpack.c.l.b16 %v181
    %v624 = vunpack.c.h.b16 %v181
    %v625 = vunpack.c.l.b16 %v182
    %v626 = vunpack.c.h.b16 %v182
    %v627 = vunpack.c.l.b16 %v183
    %v628 = vunpack.c.h.b16 %v183
    %v629 = vunpack.c.l.b16 %v184
    %v630 = vunpack.c.h.b16 %v184
    %v631 = vunpack.c.l.b16 %v185
    %v632 = vunpack.c.h.b16 %v185
    %v633 = vunpack.c.l.b16 %v186
    %v634 = vunpack.c.h.b16 %v186
    %v635 = vunpack.c.l.b16 %v187
    %v636 = vunpack.c.h.b16 %v187
    %v637 = vunpack.c.l.b16 %v188
    %v638 = vunpack.c.h.b16 %v188
    %v639 = vunpack.c.l.b16 %v189
    %v640 = vunpack.c.h.b16 %v189
    %v641 = vunpack.c.l.b16 %v190
    %v642 = vunpack.c.h.b16 %v190
    %v643 = vunpack.c.l.b16 %v191
    %v644 = vunpack.c.h.b16 %v191
    %v645 = vunpack.c.l.b16 %v192
    %v646 = vunpack.c.h.b16 %v192
    %v647 = vunpack.c.l.b16 %v193
    %v648 = vunpack.c.h.b16 %v193
    %v649 = vunpack.c.l.b16 %v194
    %v650 = vunpack.c.h.b16 %v194
    %v651 = vunpack.c.l.b16 %v195
    %v652 = vunpack.c.h.b16 %v195
    %v653 = vunpack.c.l.b16 %v196
    %v654 = vunpack.c.h.b16 %v196
    %v655 = vunpack.c.l.b16 %v197
    %v656 = vunpack.c.h.b16 %v197
    %v657 = vunpack.c.l.b16 %v198
    %v658 = vunpack.c.h.b16 %v198
    %v659 = vunpack.c.l.b16 %v199
    %v660 = vunpack.c.h.b16 %v199
    %v661 = vunpack.c.l.b16 %v200
    %v662 = vunpack.c.h.b16 %v200
    %v663 = vunpack.c.l.b16 %v201
    %v664 = vunpack.c.h.b16 %v201
    %v665 = vunpack.c.l.b16 %v202
    %v666 = vunpack.c.h.b16 %v202
    %v667 = vunpack.c.l.b16 %v203
    %v668 = vunpack.c.h.b16 %v203
    %v669 = vunpack.c.l.b16 %v204
    %v670 = vunpack.c.h.b16 %v204
    %v671 = vunpack.c.l.b16 %v205
    %v672 = vunpack.c.h.b16 %v205
    %v673 = vunpack.c.l.b16 %v206
    %v674 = vunpack.c.h.b16 %v206
    %v675 = vunpack.c.l.b16 %v207
    %v676 = vunpack.c.h.b16 %v207
    %v677 = vunpack.c.l.b16 %v208
    %v678 = vunpack.c.h.b16 %v208
    %v679 = vunpack.c.l.b16 %v209
    %v680 = vunpack.c.h.b16 %v209
    %v681 = vunpack.c.l.b16 %v210
    %v682 = vunpack.c.h.b16 %v210
    %v683 = vunpack.c.l.b16 %v211
    %v684 = vunpack.c.h.b16 %v211
    %v685 = vunpack.c.l.b16 %v212
    %v686 = vunpack.c.h.b16 %v212
    %v687 = vunpack.c.l.b16 %v213
    %v688 = vunpack.c.h.b16 %v213
    %v689 = vunpack.c.l.b16 %v214
    %v690 = vunpack.c.h.b16 %v214
    %v691 = vunpack.c.l.b16 %v215
    %v692 = vunpack.c.h.b16 %v215
    %v693 = vunpack.c.l.b16 %v216
    %v694 = vunpack.c.h.b16 %v216
    %v695 = vunpack.c.l.b16 %v217
    %v696 = vunpack.c.h.b16 %v217
    %v697 = vunpack.c.l.b16 %v218
    %v698 = vunpack.c.h.b16 %v218
    %v699 = vunpack.c.l.b16 %v219
    %v700 = vunpack.c.h.b16 %v219
    %v701 = vunpack.c.l.b16 %v220
    %v702 = vunpack.c.h.b16 %v220
    %v703 = vunpack.c.l.b16 %v221
    %v704 = vunpack.c.h.b16 %v221
    %v705 = vunpack.c.l.b16 %v222
    %v706 = vunpack.c.h.b16 %v222
    %v707 = vunpack.c.l.b16 %v223
    %v708 = vunpack.c.h.b16 %v223
    %v709 = vunpack.c.l.b16 %v224
    %v710 = vunpack.c.h.b16 %v224
    %v711 = vunpack.c.l.b16 %v225
    %v712 = vunpack.c.h.b16 %v225
    %v713 = vunpack.c.l.b16 %v226
    %v714 = vunpack.c.h.b16 %v226
    %v715 = vunpack.c.l.b16 %v227
    %v716 = vunpack.c.h.b16 %v227
    %v717 = vunpack.c.l.b16 %v228
    %v718 = vunpack.c.h.b16 %v228
    %v719 = vunpack.c.l.b16 %v229
    %v720 = vunpack.c.h.b16 %v229
    %v721 = vunpack.c.l.b16 %v230
    %v722 = vunpack.c.h.b16 %v230
    %v723 = vunpack.c.l.b16 %v231
    %v724 = vunpack.c.h.b16 %v231
    %v725 = vunpack.c.l.b16 %v232
    %v726 = vunpack.c.h.b16 %v232
    %v727 = vunpack.c.l.b16 %v233
    %v728 = vunpack.c.h.b16 %v233
    %v729 = vunpack.c.l.b16 %v234
    %v730 = vunpack.c.h.b16 %v234
    %v731 = vunpack.c.l.b16 %v235
    %v732 = vunpack.c.h.b16 %v235
    %v733 = vunpack.c.l.b16 %v236
    %v734 = vunpack.c.h.b16 %v236
    %v735 = vunpack.c.l.b16 %v237
    %v736 = vunpack.c.h.b16 %v237
    %v737 = vunpack.c.l.b16 %v238
    %v738 = vunpack.c.h.b16 %v238
    %v739 = vunpack.c.l.b16 %v239
    %v740 = vunpack.c.h.b16 %v239
    %v741 = vunpack.c.l.b16 %v240
    %v742 = vunpack.c.h.b16 %v240
    %v743 = vunpack.c.l.b16 %v241
    %v744 = vunpack.c.h.b16 %v241
    %v745 = vunpack.c.l.b16 %v242
    %v746 = vunpack.c.h.b16 %v242
    %v747 = vunpack.c.l.b16 %v243
    %v748 = vunpack.c.h.b16 %v243
    %v749 = vunpack.c.l.b16 %v244
    %v750 = vunpack.c.h.b16 %v244
    %v751 = vunpack.c.l.b16 %v245
    %v752 = vunpack.c.h.b16 %v245
    %v753 = vunpack.c.l.b16 %v246
    %v754 = vunpack.c.h.b16 %v246
    %v755 = vunpack.c.l.b16 %v247
    %v756 = vunpack.c.h.b16 %v247
    %v757 = vunpack.c.l.b16 %v248
    %v758 = vunpack.c.h.b16 %v248
    %v759 = vunpack.c.l.b16 %v249
    %v760 = vunpack.c.h.b16 %v249
    %v761 = vpack.c.b16 %v451, %v441
    %v762 = vpack.c.b16 %v452, %v442
    %v763 = vpack.c.b16 %v453, %v443
    %v764 = vpack.c.b16 %v454, %v444
    %v765 = vpack.c.b16 %v455, %v445
    %v766 = vpack.c.b16 %v456, %v446
    %v767 = vpack.c.b16 %v457, %v447
    %v768 = vpack.c.b16 %v458, %v448
    %v769 = vpack.c.b16 %v459, %v449
    %v770 = vpack.c.b16 %v460, %v450
    %v771 = vpack.c.b16 %v471, %v461
    %v772 = vpack.c.b16 %v472, %v462
    %v773 = vpack.c.b16 %v473, %v463
    %v774 = vpack.c.b16 %v474, %v464
    %v775 = vpack.c.b16 %v475, %v465
    %v776 = vpack.c.b16 %v476, %v466
    %v777 = vpack.c.b16 %v477, %v467
    %v778 = vpack.c.b16 %v478, %v468
    %v779 = vpack.c.b16 %v479, %v469
    %v780 = vpack.c.b16 %v480, %v470
    %v781 = vpack.c.b16 %v491, %v481
    %v782 = vpack.c.b16 %v492, %v482
    %v783 = vpack.c.b16 %v493, %v483
    %v784 = vpack.c.b16 %v494, %v484
    %v785 = vpack.c.b16 %v495, %v485
    %v786 = vpack.c.b16 %v496, %v486
    %v787 = vpack.c.b16 %v497, %v487
    %v788 = vpack.c.b16 %v498, %v488
    %v789 = vpack.c.b16 %v499, %v489
    %v790 = vpack.c.b16 %v500, %v490
    %v791 = vpack.c.b16 %v511, %v501
    %v792 = vpack.c.b16 %v512, %v502
    %v793 = vpack.c.b16 %v513, %v503
    %v794 = vpack.c.b16 %v514, %v504
    %v795 = vpack.c.b16 %v515, %v505
    %v796 = vpack.c.b16 %v516, %v506
    %v797 = vpack.c.b16 %v517, %v507
    %v798 = vpack.c.b16 %v518, %v508
    %v799 = vpack.c.b16 %v519, %v509
    %v800 = vpack.c.b16 %v520, %v510
    %v801 = vpack.c.b16 %v531, %v521
    %v802 = vpack.c.b16 %v532, %v522
    %v803 = vpack.c.b16 %v533, %v523
    %v804 = vpack.c.b16 %v534, %v524
    %v805 = vpack.c.b16 %v535, %v525
    %v806 = vpack.c.b16 %v536, %v526
    %v807 = vpack.c.b16 %v537, %v527
    %v808 = vpack.c.b16 %v538, %v528
    %v809 = vpack.c.b16 %v539, %v529
    %v810 = vpack.c.b16 %v540, %v530
    %v811 = vpack.c.b16 %v551, %v541
    %v812 = vpack.c.b16 %v552, %v542
    %v813 = vpack.c.b16 %v553, %v543
    %v814 = vpack.c.b16 %v554, %v544
    %v815 = vpack.c.b16 %v555, %v545
    %v816 = vpack.c.b16 %v556, %v546
    %v817 = vpack.c.b16 %v557, %v547
    %v818 = vpack.c.b16 %v558, %v548
    %v819 = vpack.c.b16 %v559, %v549
    %v820 = vpack.c.b16 %v560, %v550
    %v821 = vpack.c.b16 %v571, %v561
    %v822 = vpack.c.b16 %v572, %v562
    %v823 = vpack.c.b16 %v573, %v563
    %v824 = vpack.c.b16 %v574, %v564
    %v825 = vpack.c.b16 %v575, %v565
    %v826 = vpack.c.b16 %v576, %v566
    %v827 = vpack.c.b16 %v577, %v567
    %v828 = vpack.c.b16 %v578, %v568
    %v829 = vpack.c.b16 %v579, %v569
    %v830 = vpack.c.b16 %v580, %v570
    %v831 = vpack.c.b16 %v591, %v581
    %v832 = vpack.c.b16 %v592, %v582
    %v833 = vpack.c.b16 %v593, %v583
    %v834 = vpack.c.b16 %v594, %v584
    %v835 = vpack.c.b16 %v595, %v585
    %v836 = vpack.c.b16 %v596, %v586
    %v837 = vpack.c.b16 %v597, %v587
    %v838 = vpack.c.b16 %v598, %v588
    %v839 = vpack.c.b16 %v599, %v589
    %v840 = vpack.c.b16 %v600, %v590
    %v841 = vpack.c.b16 %v611, %v601
    %v842 = vpack.c.b16 %v612, %v602
    %v843 = vpack.c.b16 %v613, %v603
    %v844 = vpack.c.b16 %v614, %v604
    %v845 = vpack.c.b16 %v615, %v605
    %v846 = vpack.c.b16 %v616, %v606
    %v847 = vpack.c.b16 %v617, %v607
    %v848 = vpack.c.b16 %v618, %v608
    %v849 = vpack.c.b16 %v619, %v609
    %v850 = vpack.c.b16 %v620, %v610
    %v851 = vpack.c.b16 %v631, %v621
    %v852 = vpack.c.b16 %v632, %v622
    %v853 = vpack.c.b16 %v633, %v623
    %v854 = vpack.c.b16 %v634, %v624
    %v855 = vpack.c.b16 %v635, %v625
    %v856 = vpack.c.b16 %v636, %v626
    %v857 = vpack.c.b16 %v637, %v627
    %v858 = vpack.c.b16 %v638, %v628
    %v859 = vpack.c.b16 %v639, %v629
    %v860 = vpack.c.b16 %v640, %v630
    %v861 = vpack.c.b16 %v651, %v641
    %v862 = vpack.c.b16 %v652, %v642
    %v863 = vpack.c.b16 %v653, %v643
    %v864 = vpack.c.b16 %v654, %v644
    %v865 = vpack.c.b16 %v655, %v645
    %v866 = vpack.c.b16 %v656, %v646
    %v867 = vpack.c.b16 %v657, %v647
    %v868 = vpack.c.b16 %v658, %v648
    %v869 = vpack.c.b16 %v659, %v649
    %v870 = vpack.c.b16 %v660, %v650
    %v871 = vpack.c.b16 %v671, %v661
    %v872 = vpack.c.b16 %v672, %v662
    %v873 = vpack.c.b16 %v673, %v663
    %v874 = vpack.c.b16 %v674, %v664
    %v875 = vpack.c.b16 %v675, %v665
    %v876 = vpack.c.b16 %v676, %v666
    %v877 = vpack.c.b16 %v677, %v667
    %v878 = vpack.c.b16 %v678, %v668
    %v879 = vpack.c.b16 %v679, %v669
    %v880 = vpack.c.b16 %v680, %v670
    %v881 = vpack.c.b16 %v691, %v681
    %v882 = vpack.c.b16 %v692, %v682
    %v883 = vpack.c.b16 %v693, %v683
    %v884 = vpack.c.b16 %v694, %v684
    %v885 = vpack.c.b16 %v695, %v685
    %v886 = vpack.c.b16 %v696, %v686
    %v887 = vpack.c.b16 %v697, %v687
    %v888 = vpack.c.b16 %v698, %v688
    %v889 = vpack.c.b16 %v699, %v689
    %v890 = vpack.c.b16 %v700, %v690
    %v891 = vpack.c.b16 %v711, %v701
    %v892 = vpack.c.b16 %v712, %v702
    %v893 = vpack.c.b16 %v713, %v703
    %v894 = vpack.c.b16 %v714, %v704
    %v895 = vpack.c.b16 %v715, %v705
    %v896 = vpack.c.b16 %v716, %v706
    %v897 = vpack.c.b16 %v717, %v707
    %v898 = vpack.c.b16 %v718, %v708
    %v899 = vpack.c.b16 %v719, %v709
    %v900 = vpack.c.b16 %v720, %v710
    %v901 = vpack.c.b16 %v731, %v721
    %v902 = vpack.c.b16 %v732, %v722
    %v903 = vpack.c.b16 %v733, %v723
    %v904 = vpack.c.b16 %v734, %v724
    %v905 = vpack.c.b16 %v735, %v725
    %v906 = vpack.c.b16 %v736, %v726
    %v907 = vpack.c.b16 %v737, %v727
    %v908 = vpack.c.b16 %v738, %v728
    %v909 = vpack.c.b16 %v739, %v729
    %v910 = vpack.c.b16 %v740, %v730
    %v911 = vpack.c.b16 %v751, %v741
    %v912 = vpack.c.b16 %v752, %v742
    %v913 = vpack.c.b16 %v753, %v743
    %v914 = vpack.c.b16 %v754, %v744
    %v915 = vpack.c.b16 %v755, %v745
    %v916 = vpack.c.b16 %v756, %v746
    %v917 = vpack.c.b16 %v757, %v747
    %v918 = vpack.c.b16 %v758, %v748
    %v919 = vpack.c.b16 %v759, %v749
    %v920 = vpack.c.b16 %v760, %v750
    %1081 = vmatpush.bf16.msra.mxu0 %v831
    %1082 = vmatpush.bf16.msra.mxu0 %v821
    %1083 = vmatpush.bf16.msra.mxu0 %v811
    %1084 = vmatpush.bf16.msra.mxu0 %v801
    %1085 = vmatpush.bf16.msra.mxu0 %v791
    %1086 = vmatpush.bf16.msra.mxu0 %v781
    %1087 = vmatpush.bf16.msra.mxu0 %v771
    %1088 = vmatpush.bf16.msra.mxu0 %v761
    %1089 = vmatmul.bf16.gmra.mxu0 %v277
    %v1090 = vpop.f32.mrf.mxu0
    %v1091 = vadd.f32 %v254, %v1090
    %v1092 = vpop.f32.mrf.mxu0
    %1093 = vdwg.mxu0
    %1094 = vmatpush.bf16.msra.mxu0 %v911
    %1095 = vmatpush.bf16.msra.mxu0 %v901
    %1096 = vmatpush.bf16.msra.mxu0 %v891
    %1097 = vmatpush.bf16.msra.mxu0 %v881
    %1098 = vmatpush.bf16.msra.mxu0 %v871
    %1099 = vmatpush.bf16.msra.mxu0 %v861
    %1100 = vmatpush.bf16.msra.mxu0 %v851
    %1101 = vmatpush.bf16.msra.mxu0 %v841
    %1102 = vmatmul.bf16.gmra.mxu0 %v278
    %v1103 = vpop.f32.mrf.mxu0
    %v1104 = vadd.f32 %v1091, %v1103
    %v1105 = vpop.f32.mrf.mxu0
    %1106 = vdwg.mxu0
    %1107 = vmatpush.bf16.msra.mxu0 %v832
    %1108 = vmatpush.bf16.msra.mxu0 %v822
    %1109 = vmatpush.bf16.msra.mxu0 %v812
    %1110 = vmatpush.bf16.msra.mxu0 %v802
    %1111 = vmatpush.bf16.msra.mxu0 %v792
    %1112 = vmatpush.bf16.msra.mxu0 %v782
    %1113 = vmatpush.bf16.msra.mxu0 %v772
    %1114 = vmatpush.bf16.msra.mxu0 %v762
    %1115 = vmatmul.bf16.gmra.mxu0 %v277
    %v1116 = vpop.f32.mrf.mxu0
    %v1117 = vadd.f32 %v255, %v1116
    %v1118 = vpop.f32.mrf.mxu0
    %1119 = vdwg.mxu0
    %1120 = vmatpush.bf16.msra.mxu0 %v912
    %1121 = vmatpush.bf16.msra.mxu0 %v902
    %1122 = vmatpush.bf16.msra.mxu0 %v892
    %1123 = vmatpush.bf16.msra.mxu0 %v882
    %1124 = vmatpush.bf16.msra.mxu0 %v872
    %1125 = vmatpush.bf16.msra.mxu0 %v862
    %1126 = vmatpush.bf16.msra.mxu0 %v852
    %1127 = vmatpush.bf16.msra.mxu0 %v842
    %1128 = vmatmul.bf16.gmra.mxu0 %v278
    %v1129 = vpop.f32.mrf.mxu0
    %v1130 = vadd.f32 %v1117, %v1129
    %v1131 = vpop.f32.mrf.mxu0
    %1132 = vdwg.mxu0
    %1133 = vmatpush.bf16.msra.mxu0 %v833
    %1134 = vmatpush.bf16.msra.mxu0 %v823
    %1135 = vmatpush.bf16.msra.mxu0 %v813
    %1136 = vmatpush.bf16.msra.mxu0 %v803
    %1137 = vmatpush.bf16.msra.mxu0 %v793
    %1138 = vmatpush.bf16.msra.mxu0 %v783
    %1139 = vmatpush.bf16.msra.mxu0 %v773
    %1140 = vmatpush.bf16.msra.mxu0 %v763
    %1141 = vmatmul.bf16.gmra.mxu0 %v277
    %v1142 = vpop.f32.mrf.mxu0
    %v1143 = vadd.f32 %v256, %v1142
    %v1144 = vpop.f32.mrf.mxu0
    %1145 = vdwg.mxu0
    %1146 = vmatpush.bf16.msra.mxu0 %v913
    %1147 = vmatpush.bf16.msra.mxu0 %v903
    %1148 = vmatpush.bf16.msra.mxu0 %v893
    %1149 = vmatpush.bf16.msra.mxu0 %v883
    %1150 = vmatpush.bf16.msra.mxu0 %v873
    %1151 = vmatpush.bf16.msra.mxu0 %v863
    %1152 = vmatpush.bf16.msra.mxu0 %v853
    %1153 = vmatpush.bf16.msra.mxu0 %v843
    %1154 = vmatmul.bf16.gmra.mxu0 %v278
    %v1155 = vpop.f32.mrf.mxu0
    %v1156 = vadd.f32 %v1143, %v1155
    %v1157 = vpop.f32.mrf.mxu0
    %1158 = vdwg.mxu0
    %1159 = vmatpush.bf16.msra.mxu0 %v834
    %1160 = vmatpush.bf16.msra.mxu0 %v824
    %1161 = vmatpush.bf16.msra.mxu0 %v814
    %1162 = vmatpush.bf16.msra.mxu0 %v804
    %1163 = vmatpush.bf16.msra.mxu0 %v794
    %1164 = vmatpush.bf16.msra.mxu0 %v784
    %1165 = vmatpush.bf16.msra.mxu0 %v774
    %1166 = vmatpush.bf16.msra.mxu0 %v764
    %1167 = vmatmul.bf16.gmra.mxu0 %v277
    %v1168 = vpop.f32.mrf.mxu0
    %v1169 = vadd.f32 %v257, %v1168
    %v1170 = vpop.f32.mrf.mxu0
    %1171 = vdwg.mxu0
    %1172 = vmatpush.bf16.msra.mxu0 %v914
    %1173 = vmatpush.bf16.msra.mxu0 %v904
    %1174 = vmatpush.bf16.msra.mxu0 %v894
    %1175 = vmatpush.bf16.msra.mxu0 %v884
    %1176 = vmatpush.bf16.msra.mxu0 %v874
    %1177 = vmatpush.bf16.msra.mxu0 %v864
    %1178 = vmatpush.bf16.msra.mxu0 %v854
    %1179 = vmatpush.bf16.msra.mxu0 %v844
    %1180 = vmatmul.bf16.gmra.mxu0 %v278
    %v1181 = vpop.f32.mrf.mxu0
    %v1182 = vadd.f32 %v1169, %v1181
    %v1183 = vpop.f32.mrf.mxu0
    %1184 = vdwg.mxu0
    %1185 = vmatpush.bf16.msra.mxu0 %v835
    %1186 = vmatpush.bf16.msra.mxu0 %v825
    %1187 = vmatpush.bf16.msra.mxu0 %v815
    %1188 = vmatpush.bf16.msra.mxu0 %v805
    %1189 = vmatpush.bf16.msra.mxu0 %v795
    %1190 = vmatpush.bf16.msra.mxu0 %v785
    %1191 = vmatpush.bf16.msra.mxu0 %v775
    %1192 = vmatpush.bf16.msra.mxu0 %v765
    %1193 = vmatmul.bf16.gmra.mxu0 %v277
    %v1194 = vpop.f32.mrf.mxu0
    %v1195 = vadd.f32 %v258, %v1194
    %v1196 = vpop.f32.mrf.mxu0
    %1197 = vdwg.mxu0
    %1198 = vmatpush.bf16.msra.mxu0 %v915
    %1199 = vmatpush.bf16.msra.mxu0 %v905
    %1200 = vmatpush.bf16.msra.mxu0 %v895
    %1201 = vmatpush.bf16.msra.mxu0 %v885
    %1202 = vmatpush.bf16.msra.mxu0 %v875
    %1203 = vmatpush.bf16.msra.mxu0 %v865
    %1204 = vmatpush.bf16.msra.mxu0 %v855
    %1205 = vmatpush.bf16.msra.mxu0 %v845
    %1206 = vmatmul.bf16.gmra.mxu0 %v278
    %v1207 = vpop.f32.mrf.mxu0
    %v1208 = vadd.f32 %v1195, %v1207
    %v1209 = vpop.f32.mrf.mxu0
    %1210 = vdwg.mxu0
    %1211 = vmatpush.bf16.msra.mxu0 %v836
    %1212 = vmatpush.bf16.msra.mxu0 %v826
    %1213 = vmatpush.bf16.msra.mxu0 %v816
    %1214 = vmatpush.bf16.msra.mxu0 %v806
    %1215 = vmatpush.bf16.msra.mxu0 %v796
    %1216 = vmatpush.bf16.msra.mxu0 %v786
    %1217 = vmatpush.bf16.msra.mxu0 %v776
    %1218 = vmatpush.bf16.msra.mxu0 %v766
    %1219 = vmatmul.bf16.gmra.mxu0 %v277
    %v1220 = vpop.f32.mrf.mxu0
    %v1221 = vadd.f32 %v259, %v1220
    %v1222 = vpop.f32.mrf.mxu0
    %1223 = vdwg.mxu0
    %1224 = vmatpush.bf16.msra.mxu0 %v916
    %1225 = vmatpush.bf16.msra.mxu0 %v906
    %1226 = vmatpush.bf16.msra.mxu0 %v896
    %1227 = vmatpush.bf16.msra.mxu0 %v886
    %1228 = vmatpush.bf16.msra.mxu0 %v876
    %1229 = vmatpush.bf16.msra.mxu0 %v866
    %1230 = vmatpush.bf16.msra.mxu0 %v856
    %1231 = vmatpush.bf16.msra.mxu0 %v846
    %1232 = vmatmul.bf16.gmra.mxu0 %v278
    %v1233 = vpop.f32.mrf.mxu0
    %v1234 = vadd.f32 %v1221, %v1233
    %v1235 = vpop.f32.mrf.mxu0
    %1236 = vdwg.mxu0
    %1237 = vmatpush.bf16.msra.mxu0 %v837
    %1238 = vmatpush.bf16.msra.mxu0 %v827
    %1239 = vmatpush.bf16.msra.mxu0 %v817
    %1240 = vmatpush.bf16.msra.mxu0 %v807
    %1241 = vmatpush.bf16.msra.mxu0 %v797
    %1242 = vmatpush.bf16.msra.mxu0 %v787
    %1243 = vmatpush.bf16.msra.mxu0 %v777
    %1244 = vmatpush.bf16.msra.mxu0 %v767
    %1245 = vmatmul.bf16.gmra.mxu0 %v277
    %v1246 = vpop.f32.mrf.mxu0
    %v1247 = vadd.f32 %v260, %v1246
    %v1248 = vpop.f32.mrf.mxu0
    %1249 = vdwg.mxu0
    %1250 = vmatpush.bf16.msra.mxu0 %v917
    %1251 = vmatpush.bf16.msra.mxu0 %v907
    %1252 = vmatpush.bf16.msra.mxu0 %v897
    %1253 = vmatpush.bf16.msra.mxu0 %v887
    %1254 = vmatpush.bf16.msra.mxu0 %v877
    %1255 = vmatpush.bf16.msra.mxu0 %v867
    %1256 = vmatpush.bf16.msra.mxu0 %v857
    %1257 = vmatpush.bf16.msra.mxu0 %v847
    %1258 = vmatmul.bf16.gmra.mxu0 %v278
    %v1259 = vpop.f32.mrf.mxu0
    %v1260 = vadd.f32 %v1247, %v1259
    %v1261 = vpop.f32.mrf.mxu0
    %1262 = vdwg.mxu0
    %1263 = vmatpush.bf16.msra.mxu0 %v838
    %1264 = vmatpush.bf16.msra.mxu0 %v828
    %1265 = vmatpush.bf16.msra.mxu0 %v818
    %1266 = vmatpush.bf16.msra.mxu0 %v808
    %1267 = vmatpush.bf16.msra.mxu0 %v798
    %1268 = vmatpush.bf16.msra.mxu0 %v788
    %1269 = vmatpush.bf16.msra.mxu0 %v778
    %1270 = vmatpush.bf16.msra.mxu0 %v768
    %1271 = vmatmul.bf16.gmra.mxu0 %v277
    %v1272 = vpop.f32.mrf.mxu0
    %v1273 = vadd.f32 %v261, %v1272
    %v1274 = vpop.f32.mrf.mxu0
    %1275 = vdwg.mxu0
    %1276 = vmatpush.bf16.msra.mxu0 %v918
    %1277 = vmatpush.bf16.msra.mxu0 %v908
    %1278 = vmatpush.bf16.msra.mxu0 %v898
    %1279 = vmatpush.bf16.msra.mxu0 %v888
    %1280 = vmatpush.bf16.msra.mxu0 %v878
    %1281 = vmatpush.bf16.msra.mxu0 %v868
    %1282 = vmatpush.bf16.msra.mxu0 %v858
    %1283 = vmatpush.bf16.msra.mxu0 %v848
    %1284 = vmatmul.bf16.gmra.mxu0 %v278
    %v1285 = vpop.f32.mrf.mxu0
    %v1286 = vadd.f32 %v1273, %v1285
    %v1287 = vpop.f32.mrf.mxu0
    %1288 = vdwg.mxu0
    %1289 = vmatpush.bf16.msra.mxu0 %v839
    %1290 = vmatpush.bf16.msra.mxu0 %v829
    %1291 = vmatpush.bf16.msra.mxu0 %v819
    %1292 = vmatpush.bf16.msra.mxu0 %v809
    %1293 = vmatpush.bf16.msra.mxu0 %v799
    %1294 = vmatpush.bf16.msra.mxu0 %v789
    %1295 = vmatpush.bf16.msra.mxu0 %v779
    %1296 = vmatpush.bf16.msra.mxu0 %v769
    %1297 = vmatmul.bf16.gmra.mxu0 %v277
    %v1298 = vpop.f32.mrf.mxu0
    %v1299 = vadd.f32 %v262, %v1298
    %v1300 = vpop.f32.mrf.mxu0
    %1301 = vdwg.mxu0
    %1302 = vmatpush.bf16.msra.mxu0 %v919
    %1303 = vmatpush.bf16.msra.mxu0 %v909
    %1304 = vmatpush.bf16.msra.mxu0 %v899
    %1305 = vmatpush.bf16.msra.mxu0 %v889
    %1306 = vmatpush.bf16.msra.mxu0 %v879
    %1307 = vmatpush.bf16.msra.mxu0 %v869
    %1308 = vmatpush.bf16.msra.mxu0 %v859
    %1309 = vmatpush.bf16.msra.mxu0 %v849
    %1310 = vmatmul.bf16.gmra.mxu0 %v278
    %v1311 = vpop.f32.mrf.mxu0
    %v1312 = vadd.f32 %v1299, %v1311
    %v1313 = vpop.f32.mrf.mxu0
    %1314 = vdwg.mxu0
    %1315 = vmatpush.bf16.msra.mxu0 %v840
    %1316 = vmatpush.bf16.msra.mxu0 %v830
    %1317 = vmatpush.bf16.msra.mxu0 %v820
    %1318 = vmatpush.bf16.msra.mxu0 %v810
    %1319 = vmatpush.bf16.msra.mxu0 %v800
    %1320 = vmatpush.bf16.msra.mxu0 %v790
    %1321 = vmatpush.bf16.msra.mxu0 %v780
    %1322 = vmatpush.bf16.msra.mxu0 %v770
    %1323 = vmatmul.bf16.gmra.mxu0 %v277
    %v1324 = vpop.f32.mrf.mxu0
    %v1325 = vadd.f32 %v263, %v1324
    %v1326 = vpop.f32.mrf.mxu0
    %1327 = vdwg.mxu0
    %1328 = vmatpush.bf16.msra.mxu0 %v920
    %1329 = vmatpush.bf16.msra.mxu0 %v910
    %1330 = vmatpush.bf16.msra.mxu0 %v900
    %1331 = vmatpush.bf16.msra.mxu0 %v890
    %1332 = vmatpush.bf16.msra.mxu0 %v880
    %1333 = vmatpush.bf16.msra.mxu0 %v870
    %1334 = vmatpush.bf16.msra.mxu0 %v860
    %1335 = vmatpush.bf16.msra.mxu0 %v850
    %1336 = vmatmul.bf16.gmra.mxu0 %v278
    %v1337 = vpop.f32.mrf.mxu0
    %v1338 = vadd.f32 %v1325, %v1337
    %v1339 = vpop.f32.mrf.mxu0
    %1340 = vdwg.mxu0
    %v1341 = vmax.f32 %v1104, %v1156
    %v1342 = vmax.f32 %v1130, %v1182
    %v1343 = vmax.f32 %v1341, %v1208
    %v1344 = vmax.f32 %v1342, %v1234
    %v1345 = vmax.f32 %v1343, %v1260
    %v1346 = vmax.f32 %v1344, %v1286
    %v1347 = vmax.f32 %v1345, %v1312
    %v1348 = vmax.f32 %v1346, %v1338
    %v1349 = vld [vmem:[%s4] sm:$0xff]
    %v1350 = vld [vmem:[%s4 + $0x8] sm:$0xff]
    %v1351 = vld [vmem:[%s4 + $0x10] sm:$0xf]
    %v1352 = vld [vmem:[%s4 + $0x14] sm:$0x11]
    %v1353 = vld [vmem:[%s4 + $0x1c] sm:$0x11]
    %v1354 = vld [vmem:[%s4 + $0x24] sm:$0x1]
    %v1355 = vld [vmem:[%s5] sm:$0x1f]
    %v1357 = vperm.slane %v1355, 0
    %v1358 = vperm.slane %v1355, 1
    %v1359 = vperm.slane %v1355, 2
    %v1360 = vperm.slane %v1355, 3
    %v1361 = vperm.slane %v1355, 4
    %v1373 = vunpack.c.l.b16 %v1349
    %v1374 = vunpack.c.h.b16 %v1349
    %v1375 = vunpack.c.l.b16 %v1350
    %v1376 = vunpack.c.h.b16 %v1350
    %v1377 = vunpack.c.l.b16 %v1351
    %v1378 = vunpack.c.l.b16 %v1352
    %v1379 = vunpack.c.h.b16 %v1352
    %v1380 = vunpack.c.l.b16 %v1353
    %v1381 = vunpack.c.h.b16 %v1353
    %v1382 = vunpack.c.l.b16 %v1354
    %v1383 = vpack.c.b16 %v1378, %v1373
    %v1384 = vpack.c.b16 %v1379, %v1374
    %v1385 = vpack.c.b16 %v1380, %v1375
    %v1386 = vpack.c.b16 %v1381, %v1376
    %v1387 = vpack.c.b16 %v1382, %v1377
    %vm1388 = vcmask 80896
    %v1390 = vsel %vm1388, %v89, 0
    %vm1392 = vcmask 1044480
    %v1394 = vsel %vm1392, %v1383, 0
    %v1397 = vsel %vm1392, %v1384, 0
    %v1400 = vsel %vm1392, %v1385, 0
    %v1403 = vsel %vm1392, %v1386, 0
    %v1406 = vsel %vm1392, %v1387, 0
    %1408 = vmatpush.bf16.msra.mxu0 0
    %1409 = vmatpush.bf16.msra.mxu0 0
    %1410 = vmatpush.bf16.msra.mxu0 0
    %1411 = vmatpush.bf16.msra.mxu0 0
    %1412 = vmatpush.bf16.msra.mxu0 0
    %1413 = vmatpush.bf16.msra.mxu0 0
    %1414 = vmatpush.bf16.msra.mxu0 0
    %1415 = vmatpush.bf16.msra.mxu0 %v1394
    %1416 = vmatmul.bf16.gmra.mxu0 %v1390
    %v1417 = vpop.f32.mrf.mxu0
    %v1418 = vadd.f32 %v1357, %v1417
    %v1419 = vpop.f32.mrf.mxu0
    %1420 = vdwg.mxu0
    %1421 = vmatpush.bf16.msra.mxu0 0
    %1422 = vmatpush.bf16.msra.mxu0 0
    %1423 = vmatpush.bf16.msra.mxu0 0
    %1424 = vmatpush.bf16.msra.mxu0 0
    %1425 = vmatpush.bf16.msra.mxu0 0
    %1426 = vmatpush.bf16.msra.mxu0 0
    %1427 = vmatpush.bf16.msra.mxu0 0
    %1428 = vmatpush.bf16.msra.mxu0 %v1397
    %1429 = vmatmul.bf16.gmra.mxu0 %v1390
    %v1430 = vpop.f32.mrf.mxu0
    %v1431 = vadd.f32 %v1358, %v1430
    %v1432 = vpop.f32.mrf.mxu0
    %1433 = vdwg.mxu0
    %1434 = vmatpush.bf16.msra.mxu0 0
    %1435 = vmatpush.bf16.msra.mxu0 0
    %1436 = vmatpush.bf16.msra.mxu0 0
    %1437 = vmatpush.bf16.msra.mxu0 0
    %1438 = vmatpush.bf16.msra.mxu0 0
    %1439 = vmatpush.bf16.msra.mxu0 0
    %1440 = vmatpush.bf16.msra.mxu0 0
    %1441 = vmatpush.bf16.msra.mxu0 %v1400
    %1442 = vmatmul.bf16.gmra.mxu0 %v1390
    %v1443 = vpop.f32.mrf.mxu0
    %v1444 = vadd.f32 %v1359, %v1443
    %v1445 = vpop.f32.mrf.mxu0
    %1446 = vdwg.mxu0
    %1447 = vmatpush.bf16.msra.mxu0 0
    %1448 = vmatpush.bf16.msra.mxu0 0
    %1449 = vmatpush.bf16.msra.mxu0 0
    %1450 = vmatpush.bf16.msra.mxu0 0
    %1451 = vmatpush.bf16.msra.mxu0 0
    %1452 = vmatpush.bf16.msra.mxu0 0
    %1453 = vmatpush.bf16.msra.mxu0 0
    %1454 = vmatpush.bf16.msra.mxu0 %v1403
    %1455 = vmatmul.bf16.gmra.mxu0 %v1390
    %v1456 = vpop.f32.mrf.mxu0
    %v1457 = vadd.f32 %v1360, %v1456
    %v1458 = vpop.f32.mrf.mxu0
    %1459 = vdwg.mxu0
    %1460 = vmatpush.bf16.msra.mxu0 0
    %1461 = vmatpush.bf16.msra.mxu0 0
    %1462 = vmatpush.bf16.msra.mxu0 0
    %1463 = vmatpush.bf16.msra.mxu0 0
    %1464 = vmatpush.bf16.msra.mxu0 0
    %1465 = vmatpush.bf16.msra.mxu0 0
    %1466 = vmatpush.bf16.msra.mxu0 0
    %1467 = vmatpush.bf16.msra.mxu0 %v1406
    %1468 = vmatmul.bf16.gmra.mxu0 %v1390
    %v1469 = vpop.f32.mrf.mxu0
    %v1470 = vadd.f32 %v1361, %v1469
    %v1471 = vpop.f32.mrf.mxu0
    %1472 = vdwg.mxu0
    %v1473 = vmax.f32 %v1418, %v1431
    %v1474 = vmax.f32 %v1473, %v1444
    %v1475 = vmax.f32 %v1474, %v1457
    %v1476 = vmax.f32 %v1475, %v1470
    %v1477 = vpack.c.bf16 %v1347, %v1347
    %v1478 = vpack.c.bf16 %v1348, %v1348
    %v1479 = vld [vmem:[#allocation5] sm:$0xff]
    %v1480 = vld [vmem:[#allocation5 + $0x8] sm:$0xff]
    %v1481 = vld [vmem:[#allocation5 + $0x10] sm:$0xff]
    %v1482 = vld [vmem:[#allocation5 + $0x18] sm:$0xff]
    %v1483 = vld [vmem:[#allocation5 + $0x20] sm:$0xff]
    %v1484 = vld [vmem:[#allocation5 + $0x28] sm:$0xff]
    %v1485 = vld [vmem:[#allocation5 + $0x30] sm:$0xff]
    %v1486 = vld [vmem:[#allocation5 + $0x38] sm:$0xff]
    %v1487 = vld [vmem:[#allocation5 + $0x40] sm:$0xff]
    %v1488 = vld [vmem:[#allocation5 + $0x48] sm:$0xff]
    %v1489 = vld [vmem:[#allocation5 + $0x50] sm:$0xff]
    %v1490 = vld [vmem:[#allocation5 + $0x58] sm:$0xff]
    %v1491 = vld [vmem:[#allocation5 + $0x60] sm:$0xff]
    %v1492 = vld [vmem:[#allocation5 + $0x68] sm:$0xff]
    %v1493 = vld [vmem:[#allocation5 + $0x70] sm:$0xff]
    %v1494 = vld [vmem:[#allocation5 + $0x78] sm:$0xff]
    %v1495 = vld [vmem:[#allocation5 + $0x80] sm:$0xff]
    %v1496 = vld [vmem:[#allocation5 + $0x88] sm:$0xff]
    %v1497 = vld [vmem:[#allocation5 + $0x90] sm:$0xff]
    %v1498 = vld [vmem:[#allocation5 + $0x98] sm:$0xff]
    %v1499 = vld [vmem:[#allocation5 + $0xa0] sm:$0xff]
    %v1500 = vld [vmem:[#allocation5 + $0xa8] sm:$0xff]
    %v1501 = vld [vmem:[#allocation5 + $0xb0] sm:$0xff]
    %v1502 = vld [vmem:[#allocation5 + $0xb8] sm:$0xff]
    %v1503 = vld [vmem:[#allocation5 + $0xc0] sm:$0xff]
    %v1504 = vld [vmem:[#allocation5 + $0xc8] sm:$0xff]
    %v1505 = vld [vmem:[#allocation5 + $0xd0] sm:$0xff]
    %v1506 = vld [vmem:[#allocation5 + $0xd8] sm:$0xff]
    %v1507 = vld [vmem:[#allocation5 + $0xe0] sm:$0xff]
    %v1508 = vld [vmem:[#allocation5 + $0xe8] sm:$0xff]
    %v1509 = vld [vmem:[#allocation5 + $0xf0] sm:$0xff]
    %v1510 = vld [vmem:[#allocation5 + $0xf8] sm:$0xff]
    %v1511 = vld [vmem:[#allocation5 + $0x100] sm:$0xff]
    %v1512 = vld [vmem:[#allocation5 + $0x108] sm:$0xff]
    %v1513 = vld [vmem:[#allocation5 + $0x110] sm:$0xff]
    %v1514 = vld [vmem:[#allocation5 + $0x118] sm:$0xff]
    %v1515 = vld [vmem:[#allocation5 + $0x120] sm:$0xff]
    %v1516 = vld [vmem:[#allocation5 + $0x128] sm:$0xff]
    %v1517 = vld [vmem:[#allocation5 + $0x130] sm:$0xff]
    %v1518 = vld [vmem:[#allocation5 + $0x138] sm:$0xff]
    %v1519 = vld [vmem:[#allocation5 + $0x140] sm:$0xff]
    %v1520 = vld [vmem:[#allocation5 + $0x148] sm:$0xff]
    %v1521 = vld [vmem:[#allocation5 + $0x150] sm:$0xff]
    %v1522 = vld [vmem:[#allocation5 + $0x158] sm:$0xff]
    %v1523 = vld [vmem:[#allocation5 + $0x160] sm:$0xff]
    %v1524 = vld [vmem:[#allocation5 + $0x168] sm:$0xff]
    %v1525 = vld [vmem:[#allocation5 + $0x170] sm:$0xff]
    %v1526 = vld [vmem:[#allocation5 + $0x178] sm:$0xff]
    %v1527 = vld [vmem:[#allocation5 + $0x180] sm:$0xff]
    %v1528 = vld [vmem:[#allocation5 + $0x188] sm:$0xff]
    %v1529 = vld [vmem:[#allocation5 + $0x190] sm:$0xff]
    %v1530 = vld [vmem:[#allocation5 + $0x198] sm:$0xff]
    %v1531 = vld [vmem:[#allocation5 + $0x1a0] sm:$0xff]
    %v1532 = vld [vmem:[#allocation5 + $0x1a8] sm:$0xff]
    %v1533 = vld [vmem:[#allocation5 + $0x1b0] sm:$0xff]
    %v1534 = vld [vmem:[#allocation5 + $0x1b8] sm:$0xff]
    %v1535 = vld [vmem:[#allocation5 + $0x1c0] sm:$0xff]
    %v1536 = vld [vmem:[#allocation5 + $0x1c8] sm:$0xff]
    %v1537 = vld [vmem:[#allocation5 + $0x1d0] sm:$0xff]
    %v1538 = vld [vmem:[#allocation5 + $0x1d8] sm:$0xff]
    %v1539 = vld [vmem:[#allocation5 + $0x1e0] sm:$0xff]
    %v1540 = vld [vmem:[#allocation5 + $0x1e8] sm:$0xff]
    %v1541 = vld [vmem:[#allocation5 + $0x1f0] sm:$0xff]
    %v1542 = vld [vmem:[#allocation5 + $0x1f8] sm:$0xff]
    %v1543 = vld [vmem:[#allocation5 + $0x200] sm:$0xff]
    %v1544 = vld [vmem:[#allocation5 + $0x208] sm:$0xff]
    %v1545 = vld [vmem:[#allocation5 + $0x210] sm:$0xff]
    %v1546 = vld [vmem:[#allocation5 + $0x218] sm:$0xff]
    %v1547 = vld [vmem:[#allocation5 + $0x220] sm:$0xff]
    %v1548 = vld [vmem:[#allocation5 + $0x228] sm:$0xff]
    %v1549 = vld [vmem:[#allocation5 + $0x230] sm:$0xff]
    %v1550 = vld [vmem:[#allocation5 + $0x238] sm:$0xff]
    %v1551 = vld [vmem:[#allocation5 + $0x240] sm:$0xff]
    %v1552 = vld [vmem:[#allocation5 + $0x248] sm:$0xff]
    %v1553 = vld [vmem:[#allocation5 + $0x250] sm:$0xff]
    %v1554 = vld [vmem:[#allocation5 + $0x258] sm:$0xff]
    %v1555 = vld [vmem:[#allocation5 + $0x260] sm:$0xff]
    %v1556 = vld [vmem:[#allocation5 + $0x268] sm:$0xff]
    %v1557 = vld [vmem:[#allocation5 + $0x270] sm:$0xff]
    %v1558 = vld [vmem:[#allocation5 + $0x278] sm:$0xff]
    %v1559 = vld [vmem:[#allocation5 + $0x280] sm:$0xff]
    %v1560 = vld [vmem:[#allocation5 + $0x288] sm:$0xff]
    %v1561 = vld [vmem:[#allocation5 + $0x290] sm:$0xff]
    %v1562 = vld [vmem:[#allocation5 + $0x298] sm:$0xff]
    %v1563 = vld [vmem:[#allocation5 + $0x2a0] sm:$0xff]
    %v1564 = vld [vmem:[#allocation5 + $0x2a8] sm:$0xff]
    %v1565 = vld [vmem:[#allocation5 + $0x2b0] sm:$0xff]
    %v1566 = vld [vmem:[#allocation5 + $0x2b8] sm:$0xff]
    %v1567 = vld [vmem:[#allocation5 + $0x2c0] sm:$0xff]
    %v1568 = vld [vmem:[#allocation5 + $0x2c8] sm:$0xff]
    %v1569 = vld [vmem:[#allocation5 + $0x2d0] sm:$0xff]
    %v1570 = vld [vmem:[#allocation5 + $0x2d8] sm:$0xff]
    %v1571 = vld [vmem:[#allocation5 + $0x2e0] sm:$0xff]
    %v1572 = vld [vmem:[#allocation5 + $0x2e8] sm:$0xff]
    %v1573 = vld [vmem:[#allocation5 + $0x2f0] sm:$0xff]
    %v1574 = vld [vmem:[#allocation5 + $0x2f8] sm:$0xff]
    %v1575 = vld [vmem:[#allocation5 + $0x300] sm:$0xff]
    %v1576 = vld [vmem:[#allocation5 + $0x308] sm:$0xff]
    %v1577 = vld [vmem:[#allocation5 + $0x310] sm:$0xff]
    %v1578 = vld [vmem:[#allocation5 + $0x318] sm:$0xff]
    %v1579 = vld [vmem:[#allocation5 + $0x320] sm:$0xff]
    %v1580 = vld [vmem:[#allocation5 + $0x328] sm:$0xff]
    %v1581 = vld [vmem:[#allocation5 + $0x330] sm:$0xff]
    %v1582 = vld [vmem:[#allocation5 + $0x338] sm:$0xff]
    %v1583 = vld [vmem:[#allocation5 + $0x340] sm:$0xff]
    %v1584 = vld [vmem:[#allocation5 + $0x348] sm:$0xff]
    %v1585 = vld [vmem:[#allocation5 + $0x350] sm:$0xff]
    %v1586 = vld [vmem:[#allocation5 + $0x358] sm:$0xff]
    %v1587 = vld [vmem:[#allocation5 + $0x360] sm:$0xff]
    %v1588 = vld [vmem:[#allocation5 + $0x368] sm:$0xff]
    %v1589 = vld [vmem:[#allocation5 + $0x370] sm:$0xff]
    %v1590 = vld [vmem:[#allocation5 + $0x378] sm:$0xff]
    %v1591 = vld [vmem:[#allocation5 + $0x380] sm:$0xff]
    %v1592 = vld [vmem:[#allocation5 + $0x388] sm:$0xff]
    %v1593 = vld [vmem:[#allocation5 + $0x390] sm:$0xff]
    %v1594 = vld [vmem:[#allocation5 + $0x398] sm:$0xff]
    %v1595 = vld [vmem:[#allocation5 + $0x3a0] sm:$0xff]
    %v1596 = vld [vmem:[#allocation5 + $0x3a8] sm:$0xff]
    %v1597 = vld [vmem:[#allocation5 + $0x3b0] sm:$0xff]
    %v1598 = vld [vmem:[#allocation5 + $0x3b8] sm:$0xff]
    %v1599 = vld [vmem:[#allocation5 + $0x3c0] sm:$0xff]
    %v1600 = vld [vmem:[#allocation5 + $0x3c8] sm:$0xff]
    %v1601 = vld [vmem:[#allocation5 + $0x3d0] sm:$0xff]
    %v1602 = vld [vmem:[#allocation5 + $0x3d8] sm:$0xff]
    %v1603 = vld [vmem:[#allocation5 + $0x3e0] sm:$0xff]
    %v1604 = vld [vmem:[#allocation5 + $0x3e8] sm:$0xff]
    %v1605 = vld [vmem:[#allocation5 + $0x3f0] sm:$0xff]
    %v1606 = vld [vmem:[#allocation5 + $0x3f8] sm:$0xff]
    %v1607 = vpack.c.bf16 %v1476, %v1476
    %v1608 = vld [vmem:[#allocation7] sm:$0xff]
    %v1609 = vld [vmem:[#allocation7 + $0x8] sm:$0xff]
    %v1610 = vld [vmem:[#allocation7 + $0x10] sm:$0xff]
    %v1611 = vld [vmem:[#allocation7 + $0x18] sm:$0xff]
    %v1612 = vld [vmem:[#allocation7 + $0x20] sm:$0xff]
    %v1613 = vld [vmem:[#allocation7 + $0x28] sm:$0xff]
    %v1614 = vld [vmem:[#allocation7 + $0x30] sm:$0xff]
    %v1615 = vld [vmem:[#allocation7 + $0x38] sm:$0xff]
    %v1616 = vld [vmem:[#allocation7 + $0x40] sm:$0xff]
    %v1617 = vld [vmem:[#allocation7 + $0x48] sm:$0xff]
    %v1618 = vld [vmem:[#allocation7 + $0x50] sm:$0xff]
    %v1619 = vld [vmem:[#allocation7 + $0x58] sm:$0xff]
    %v1620 = vld [vmem:[#allocation7 + $0x60] sm:$0xff]
    %v1621 = vld [vmem:[#allocation7 + $0x68] sm:$0xff]
    %v1622 = vld [vmem:[#allocation7 + $0x70] sm:$0xff]
    %v1623 = vld [vmem:[#allocation7 + $0x78] sm:$0xff]
    %v1624 = vld [vmem:[#allocation7 + $0x80] sm:$0xff]
    %v1625 = vld [vmem:[#allocation7 + $0x88] sm:$0xff]
    %v1626 = vld [vmem:[#allocation7 + $0x90] sm:$0xff]
    %v1627 = vld [vmem:[#allocation7 + $0x98] sm:$0xff]
    %v1628 = vld [vmem:[#allocation7 + $0xa0] sm:$0xff]
    %v1629 = vld [vmem:[#allocation7 + $0xa8] sm:$0xff]
    %v1630 = vld [vmem:[#allocation7 + $0xb0] sm:$0xff]
    %v1631 = vld [vmem:[#allocation7 + $0xb8] sm:$0xff]
    %v1632 = vld [vmem:[#allocation7 + $0xc0] sm:$0xff]
    %v1633 = vld [vmem:[#allocation7 + $0xc8] sm:$0xff]
    %v1634 = vld [vmem:[#allocation7 + $0xd0] sm:$0xff]
    %v1635 = vld [vmem:[#allocation7 + $0xd8] sm:$0xff]
    %v1636 = vld [vmem:[#allocation7 + $0xe0] sm:$0xff]
    %v1637 = vld [vmem:[#allocation7 + $0xe8] sm:$0xff]
    %v1638 = vld [vmem:[#allocation7 + $0xf0] sm:$0xff]
    %v1639 = vld [vmem:[#allocation7 + $0xf8] sm:$0xff]
    %v1640 = vld [vmem:[#allocation7 + $0x100] sm:$0xff]
    %v1641 = vld [vmem:[#allocation7 + $0x108] sm:$0xff]
    %v1642 = vld [vmem:[#allocation7 + $0x110] sm:$0xff]
    %v1643 = vld [vmem:[#allocation7 + $0x118] sm:$0xff]
    %v1644 = vld [vmem:[#allocation7 + $0x120] sm:$0xff]
    %v1645 = vld [vmem:[#allocation7 + $0x128] sm:$0xff]
    %v1646 = vld [vmem:[#allocation7 + $0x130] sm:$0xff]
    %v1647 = vld [vmem:[#allocation7 + $0x138] sm:$0xff]
    %v1648 = vld [vmem:[#allocation7 + $0x140] sm:$0xff]
    %v1649 = vld [vmem:[#allocation7 + $0x148] sm:$0xff]
    %v1650 = vld [vmem:[#allocation7 + $0x150] sm:$0xff]
    %v1651 = vld [vmem:[#allocation7 + $0x158] sm:$0xff]
    %v1652 = vld [vmem:[#allocation7 + $0x160] sm:$0xff]
    %v1653 = vld [vmem:[#allocation7 + $0x168] sm:$0xff]
    %v1654 = vld [vmem:[#allocation7 + $0x170] sm:$0xff]
    %v1655 = vld [vmem:[#allocation7 + $0x178] sm:$0xff]
    %v1656 = vld [vmem:[#allocation7 + $0x180] sm:$0xff]
    %v1657 = vld [vmem:[#allocation7 + $0x188] sm:$0xff]
    %v1658 = vld [vmem:[#allocation7 + $0x190] sm:$0xff]
    %v1659 = vld [vmem:[#allocation7 + $0x198] sm:$0xff]
    %v1660 = vld [vmem:[#allocation7 + $0x1a0] sm:$0xff]
    %v1661 = vld [vmem:[#allocation7 + $0x1a8] sm:$0xff]
    %v1662 = vld [vmem:[#allocation7 + $0x1b0] sm:$0xff]
    %v1663 = vld [vmem:[#allocation7 + $0x1b8] sm:$0xff]
    %v1664 = vld [vmem:[#allocation7 + $0x1c0] sm:$0xff]
    %v1665 = vld [vmem:[#allocation7 + $0x1c8] sm:$0xff]
    %v1666 = vld [vmem:[#allocation7 + $0x1d0] sm:$0xff]
    %v1667 = vld [vmem:[#allocation7 + $0x1d8] sm:$0xff]
    %v1668 = vld [vmem:[#allocation7 + $0x1e0] sm:$0xff]
    %v1669 = vld [vmem:[#allocation7 + $0x1e8] sm:$0xff]
    %v1670 = vld [vmem:[#allocation7 + $0x1f0] sm:$0xff]
    %v1671 = vld [vmem:[#allocation7 + $0x1f8] sm:$0xff]
    %v1736 = vunpack.c.l.b16 %v1608
    %v1737 = vunpack.c.h.b16 %v1608
    %v1738 = vunpack.c.l.b16 %v1609
    %v1739 = vunpack.c.h.b16 %v1609
    %v1740 = vunpack.c.l.b16 %v1610
    %v1741 = vunpack.c.h.b16 %v1610
    %v1742 = vunpack.c.l.b16 %v1611
    %v1743 = vunpack.c.h.b16 %v1611
    %v1744 = vunpack.c.l.b16 %v1612
    %v1745 = vunpack.c.h.b16 %v1612
    %v1746 = vunpack.c.l.b16 %v1613
    %v1747 = vunpack.c.h.b16 %v1613
    %v1748 = vunpack.c.l.b16 %v1614
    %v1749 = vunpack.c.h.b16 %v1614
    %v1750 = vunpack.c.l.b16 %v1615
    %v1751 = vunpack.c.h.b16 %v1615
    %v1752 = vunpack.c.l.b16 %v1616
    %v1753 = vunpack.c.h.b16 %v1616
    %v1754 = vunpack.c.l.b16 %v1617
    %v1755 = vunpack.c.h.b16 %v1617
    %v1756 = vunpack.c.l.b16 %v1618
    %v1757 = vunpack.c.h.b16 %v1618
    %v1758 = vunpack.c.l.b16 %v1619
    %v1759 = vunpack.c.h.b16 %v1619
    %v1760 = vunpack.c.l.b16 %v1620
    %v1761 = vunpack.c.h.b16 %v1620
    %v1762 = vunpack.c.l.b16 %v1621
    %v1763 = vunpack.c.h.b16 %v1621
    %v1764 = vunpack.c.l.b16 %v1622
    %v1765 = vunpack.c.h.b16 %v1622
    %v1766 = vunpack.c.l.b16 %v1623
    %v1767 = vunpack.c.h.b16 %v1623
    %v1768 = vunpack.c.l.b16 %v1624
    %v1769 = vunpack.c.h.b16 %v1624
    %v1770 = vunpack.c.l.b16 %v1625
    %v1771 = vunpack.c.h.b16 %v1625
    %v1772 = vunpack.c.l.b16 %v1626
    %v1773 = vunpack.c.h.b16 %v1626
    %v1774 = vunpack.c.l.b16 %v1627
    %v1775 = vunpack.c.h.b16 %v1627
    %v1776 = vunpack.c.l.b16 %v1628
    %v1777 = vunpack.c.h.b16 %v1628
    %v1778 = vunpack.c.l.b16 %v1629
    %v1779 = vunpack.c.h.b16 %v1629
    %v1780 = vunpack.c.l.b16 %v1630
    %v1781 = vunpack.c.h.b16 %v1630
    %v1782 = vunpack.c.l.b16 %v1631
    %v1783 = vunpack.c.h.b16 %v1631
    %v1784 = vunpack.c.l.b16 %v1632
    %v1785 = vunpack.c.h.b16 %v1632
    %v1786 = vunpack.c.l.b16 %v1633
    %v1787 = vunpack.c.h.b16 %v1633
    %v1788 = vunpack.c.l.b16 %v1634
    %v1789 = vunpack.c.h.b16 %v1634
    %v1790 = vunpack.c.l.b16 %v1635
    %v1791 = vunpack.c.h.b16 %v1635
    %v1792 = vunpack.c.l.b16 %v1636
    %v1793 = vunpack.c.h.b16 %v1636
    %v1794 = vunpack.c.l.b16 %v1637
    %v1795 = vunpack.c.h.b16 %v1637
    %v1796 = vunpack.c.l.b16 %v1638
    %v1797 = vunpack.c.h.b16 %v1638
    %v1798 = vunpack.c.l.b16 %v1639
    %v1799 = vunpack.c.h.b16 %v1639
    %v1800 = vunpack.c.l.b16 %v1640
    %v1801 = vunpack.c.h.b16 %v1640
    %v1802 = vunpack.c.l.b16 %v1641
    %v1803 = vunpack.c.h.b16 %v1641
    %v1804 = vunpack.c.l.b16 %v1642
    %v1805 = vunpack.c.h.b16 %v1642
    %v1806 = vunpack.c.l.b16 %v1643
    %v1807 = vunpack.c.h.b16 %v1643
    %v1808 = vunpack.c.l.b16 %v1644
    %v1809 = vunpack.c.h.b16 %v1644
    %v1810 = vunpack.c.l.b16 %v1645
    %v1811 = vunpack.c.h.b16 %v1645
    %v1812 = vunpack.c.l.b16 %v1646
    %v1813 = vunpack.c.h.b16 %v1646
    %v1814 = vunpack.c.l.b16 %v1647
    %v1815 = vunpack.c.h.b16 %v1647
    %v1816 = vunpack.c.l.b16 %v1648
    %v1817 = vunpack.c.h.b16 %v1648
    %v1818 = vunpack.c.l.b16 %v1649
    %v1819 = vunpack.c.h.b16 %v1649
    %v1820 = vunpack.c.l.b16 %v1650
    %v1821 = vunpack.c.h.b16 %v1650
    %v1822 = vunpack.c.l.b16 %v1651
    %v1823 = vunpack.c.h.b16 %v1651
    %v1824 = vunpack.c.l.b16 %v1652
    %v1825 = vunpack.c.h.b16 %v1652
    %v1826 = vunpack.c.l.b16 %v1653
    %v1827 = vunpack.c.h.b16 %v1653
    %v1828 = vunpack.c.l.b16 %v1654
    %v1829 = vunpack.c.h.b16 %v1654
    %v1830 = vunpack.c.l.b16 %v1655
    %v1831 = vunpack.c.h.b16 %v1655
    %v1832 = vunpack.c.l.b16 %v1656
    %v1833 = vunpack.c.h.b16 %v1656
    %v1834 = vunpack.c.l.b16 %v1657
    %v1835 = vunpack.c.h.b16 %v1657
    %v1836 = vunpack.c.l.b16 %v1658
    %v1837 = vunpack.c.h.b16 %v1658
    %v1838 = vunpack.c.l.b16 %v1659
    %v1839 = vunpack.c.h.b16 %v1659
    %v1840 = vunpack.c.l.b16 %v1660
    %v1841 = vunpack.c.h.b16 %v1660
    %v1842 = vunpack.c.l.b16 %v1661
    %v1843 = vunpack.c.h.b16 %v1661
    %v1844 = vunpack.c.l.b16 %v1662
    %v1845 = vunpack.c.h.b16 %v1662
    %v1846 = vunpack.c.l.b16 %v1663
    %v1847 = vunpack.c.h.b16 %v1663
    %v1848 = vunpack.c.l.b16 %v1664
    %v1849 = vunpack.c.h.b16 %v1664
    %v1850 = vunpack.c.l.b16 %v1665
    %v1851 = vunpack.c.h.b16 %v1665
    %v1852 = vunpack.c.l.b16 %v1666
    %v1853 = vunpack.c.h.b16 %v1666
    %v1854 = vunpack.c.l.b16 %v1667
    %v1855 = vunpack.c.h.b16 %v1667
    %v1856 = vunpack.c.l.b16 %v1668
    %v1857 = vunpack.c.h.b16 %v1668
    %v1858 = vunpack.c.l.b16 %v1669
    %v1859 = vunpack.c.h.b16 %v1669
    %v1860 = vunpack.c.l.b16 %v1670
    %v1861 = vunpack.c.h.b16 %v1670
    %v1862 = vunpack.c.l.b16 %v1671
    %v1863 = vunpack.c.h.b16 %v1671
    %v1864 = vpack.c.b16 %v1744, %v1736
    %v1865 = vpack.c.b16 %v1745, %v1737
    %v1866 = vpack.c.b16 %v1746, %v1738
    %v1867 = vpack.c.b16 %v1747, %v1739
    %v1868 = vpack.c.b16 %v1748, %v1740
    %v1869 = vpack.c.b16 %v1749, %v1741
    %v1870 = vpack.c.b16 %v1750, %v1742
    %v1871 = vpack.c.b16 %v1751, %v1743
    %v1872 = vpack.c.b16 %v1760, %v1752
    %v1873 = vpack.c.b16 %v1761, %v1753
    %v1874 = vpack.c.b16 %v1762, %v1754
    %v1875 = vpack.c.b16 %v1763, %v1755
    %v1876 = vpack.c.b16 %v1764, %v1756
    %v1877 = vpack.c.b16 %v1765, %v1757
    %v1878 = vpack.c.b16 %v1766, %v1758
    %v1879 = vpack.c.b16 %v1767, %v1759
    %v1880 = vpack.c.b16 %v1776, %v1768
    %v1881 = vpack.c.b16 %v1777, %v1769
    %v1882 = vpack.c.b16 %v1778, %v1770
    %v1883 = vpack.c.b16 %v1779, %v1771
    %v1884 = vpack.c.b16 %v1780, %v1772
    %v1885 = vpack.c.b16 %v1781, %v1773
    %v1886 = vpack.c.b16 %v1782, %v1774
    %v1887 = vpack.c.b16 %v1783, %v1775
    %v1888 = vpack.c.b16 %v1792, %v1784
    %v1889 = vpack.c.b16 %v1793, %v1785
    %v1890 = vpack.c.b16 %v1794, %v1786
    %v1891 = vpack.c.b16 %v1795, %v1787
    %v1892 = vpack.c.b16 %v1796, %v1788
    %v1893 = vpack.c.b16 %v1797, %v1789
    %v1894 = vpack.c.b16 %v1798, %v1790
    %v1895 = vpack.c.b16 %v1799, %v1791
    %v1896 = vpack.c.b16 %v1808, %v1800
    %v1897 = vpack.c.b16 %v1809, %v1801
    %v1898 = vpack.c.b16 %v1810, %v1802
    %v1899 = vpack.c.b16 %v1811, %v1803
    %v1900 = vpack.c.b16 %v1812, %v1804
    %v1901 = vpack.c.b16 %v1813, %v1805
    %v1902 = vpack.c.b16 %v1814, %v1806
    %v1903 = vpack.c.b16 %v1815, %v1807
    %v1904 = vpack.c.b16 %v1824, %v1816
    %v1905 = vpack.c.b16 %v1825, %v1817
    %v1906 = vpack.c.b16 %v1826, %v1818
    %v1907 = vpack.c.b16 %v1827, %v1819
    %v1908 = vpack.c.b16 %v1828, %v1820
    %v1909 = vpack.c.b16 %v1829, %v1821
    %v1910 = vpack.c.b16 %v1830, %v1822
    %v1911 = vpack.c.b16 %v1831, %v1823
    %v1912 = vpack.c.b16 %v1840, %v1832
    %v1913 = vpack.c.b16 %v1841, %v1833
    %v1914 = vpack.c.b16 %v1842, %v1834
    %v1915 = vpack.c.b16 %v1843, %v1835
    %v1916 = vpack.c.b16 %v1844, %v1836
    %v1917 = vpack.c.b16 %v1845, %v1837
    %v1918 = vpack.c.b16 %v1846, %v1838
    %v1919 = vpack.c.b16 %v1847, %v1839
    %v1920 = vpack.c.b16 %v1856, %v1848
    %v1921 = vpack.c.b16 %v1857, %v1849
    %v1922 = vpack.c.b16 %v1858, %v1850
    %v1923 = vpack.c.b16 %v1859, %v1851
    %v1924 = vpack.c.b16 %v1860, %v1852
    %v1925 = vpack.c.b16 %v1861, %v1853
    %v1926 = vpack.c.b16 %v1862, %v1854
    %v1927 = vpack.c.b16 %v1863, %v1855
    %1992 = vmatpush.bf16.msra.mxu0 %v1920
    %1993 = vmatpush.bf16.msra.mxu0 %v1912
    %1994 = vmatpush.bf16.msra.mxu0 %v1904
    %1995 = vmatpush.bf16.msra.mxu0 %v1896
    %1996 = vmatpush.bf16.msra.mxu0 %v1888
    %1997 = vmatpush.bf16.msra.mxu0 %v1880
    %1998 = vmatpush.bf16.msra.mxu0 %v1872
    %1999 = vmatpush.bf16.msra.mxu0 %v1864
    %2000 = vmatmul.bf16.gmra.mxu0 %v1607
    %v2001 = vpop.f32.mrf.mxu0
    %v2002 = vadd.f32 0.0, %v2001
    %v2003 = vpop.f32.mrf.mxu0
    %2004 = vdwg.mxu0
    %2005 = vmatpush.bf16.msra.mxu0 %v1921
    %2006 = vmatpush.bf16.msra.mxu0 %v1913
    %2007 = vmatpush.bf16.msra.mxu0 %v1905
    %2008 = vmatpush.bf16.msra.mxu0 %v1897
    %2009 = vmatpush.bf16.msra.mxu0 %v1889
    %2010 = vmatpush.bf16.msra.mxu0 %v1881
    %2011 = vmatpush.bf16.msra.mxu0 %v1873
    %2012 = vmatpush.bf16.msra.mxu0 %v1865
    %2013 = vmatmul.bf16.gmra.mxu0 %v1607
    %v2014 = vpop.f32.mrf.mxu0
    %v2015 = vadd.f32 0.0, %v2014
    %v2016 = vpop.f32.mrf.mxu0
    %2017 = vdwg.mxu0
    %2018 = vmatpush.bf16.msra.mxu0 %v1922
    %2019 = vmatpush.bf16.msra.mxu0 %v1914
    %2020 = vmatpush.bf16.msra.mxu0 %v1906
    %2021 = vmatpush.bf16.msra.mxu0 %v1898
    %2022 = vmatpush.bf16.msra.mxu0 %v1890
    %2023 = vmatpush.bf16.msra.mxu0 %v1882
    %2024 = vmatpush.bf16.msra.mxu0 %v1874
    %2025 = vmatpush.bf16.msra.mxu0 %v1866
    %2026 = vmatmul.bf16.gmra.mxu0 %v1607
    %v2027 = vpop.f32.mrf.mxu0
    %v2028 = vadd.f32 0.0, %v2027
    %v2029 = vpop.f32.mrf.mxu0
    %2030 = vdwg.mxu0
    %2031 = vmatpush.bf16.msra.mxu0 %v1923
    %2032 = vmatpush.bf16.msra.mxu0 %v1915
    %2033 = vmatpush.bf16.msra.mxu0 %v1907
    %2034 = vmatpush.bf16.msra.mxu0 %v1899
    %2035 = vmatpush.bf16.msra.mxu0 %v1891
    %2036 = vmatpush.bf16.msra.mxu0 %v1883
    %2037 = vmatpush.bf16.msra.mxu0 %v1875
    %2038 = vmatpush.bf16.msra.mxu0 %v1867
    %2039 = vmatmul.bf16.gmra.mxu0 %v1607
    %v2040 = vpop.f32.mrf.mxu0
    %v2041 = vadd.f32 0.0, %v2040
    %v2042 = vpop.f32.mrf.mxu0
    %2043 = vdwg.mxu0
    %2044 = vmatpush.bf16.msra.mxu0 %v1924
    %2045 = vmatpush.bf16.msra.mxu0 %v1916
    %2046 = vmatpush.bf16.msra.mxu0 %v1908
    %2047 = vmatpush.bf16.msra.mxu0 %v1900
    %2048 = vmatpush.bf16.msra.mxu0 %v1892
    %2049 = vmatpush.bf16.msra.mxu0 %v1884
    %2050 = vmatpush.bf16.msra.mxu0 %v1876
    %2051 = vmatpush.bf16.msra.mxu0 %v1868
    %2052 = vmatmul.bf16.gmra.mxu0 %v1607
    %v2053 = vpop.f32.mrf.mxu0
    %v2054 = vadd.f32 0.0, %v2053
    %v2055 = vpop.f32.mrf.mxu0
    %2056 = vdwg.mxu0
    %2057 = vmatpush.bf16.msra.mxu0 %v1925
    %2058 = vmatpush.bf16.msra.mxu0 %v1917
    %2059 = vmatpush.bf16.msra.mxu0 %v1909
    %2060 = vmatpush.bf16.msra.mxu0 %v1901
    %2061 = vmatpush.bf16.msra.mxu0 %v1893
    %2062 = vmatpush.bf16.msra.mxu0 %v1885
    %2063 = vmatpush.bf16.msra.mxu0 %v1877
    %2064 = vmatpush.bf16.msra.mxu0 %v1869
    %2065 = vmatmul.bf16.gmra.mxu0 %v1607
    %v2066 = vpop.f32.mrf.mxu0
    %v2067 = vadd.f32 0.0, %v2066
    %v2068 = vpop.f32.mrf.mxu0
    %2069 = vdwg.mxu0
    %2070 = vmatpush.bf16.msra.mxu0 %v1926
    %2071 = vmatpush.bf16.msra.mxu0 %v1918
    %2072 = vmatpush.bf16.msra.mxu0 %v1910
    %2073 = vmatpush.bf16.msra.mxu0 %v1902
    %2074 = vmatpush.bf16.msra.mxu0 %v1894
    %2075 = vmatpush.bf16.msra.mxu0 %v1886
    %2076 = vmatpush.bf16.msra.mxu0 %v1878
    %2077 = vmatpush.bf16.msra.mxu0 %v1870
    %2078 = vmatmul.bf16.gmra.mxu0 %v1607
    %v2079 = vpop.f32.mrf.mxu0
    %v2080 = vadd.f32 0.0, %v2079
    %v2081 = vpop.f32.mrf.mxu0
    %2082 = vdwg.mxu0
    %2083 = vmatpush.bf16.msra.mxu0 %v1927
    %2084 = vmatpush.bf16.msra.mxu0 %v1919
    %2085 = vmatpush.bf16.msra.mxu0 %v1911
    %2086 = vmatpush.bf16.msra.mxu0 %v1903
    %2087 = vmatpush.bf16.msra.mxu0 %v1895
    %2088 = vmatpush.bf16.msra.mxu0 %v1887
    %2089 = vmatpush.bf16.msra.mxu0 %v1879
    %2090 = vmatpush.bf16.msra.mxu0 %v1871
    %2091 = vmatmul.bf16.gmra.mxu0 %v1607
    %v2092 = vpop.f32.mrf.mxu0
    %v2093 = vadd.f32 0.0, %v2092
    %v2094 = vpop.f32.mrf.mxu0
    %2095 = vdwg.mxu0
    %v2224 = vunpack.c.l.b16 %v1479
    %v2225 = vunpack.c.h.b16 %v1479
    %v2226 = vunpack.c.l.b16 %v1480
    %v2227 = vunpack.c.h.b16 %v1480
    %v2228 = vunpack.c.l.b16 %v1481
    %v2229 = vunpack.c.h.b16 %v1481
    %v2230 = vunpack.c.l.b16 %v1482
    %v2231 = vunpack.c.h.b16 %v1482
    %v2232 = vunpack.c.l.b16 %v1483
    %v2233 = vunpack.c.h.b16 %v1483
    %v2234 = vunpack.c.l.b16 %v1484
    %v2235 = vunpack.c.h.b16 %v1484
    %v2236 = vunpack.c.l.b16 %v1485
    %v2237 = vunpack.c.h.b16 %v1485
    %v2238 = vunpack.c.l.b16 %v1486
    %v2239 = vunpack.c.h.b16 %v1486
    %v2240 = vunpack.c.l.b16 %v1487
    %v2241 = vunpack.c.h.b16 %v1487
    %v2242 = vunpack.c.l.b16 %v1488
    %v2243 = vunpack.c.h.b16 %v1488
    %v2244 = vunpack.c.l.b16 %v1489
    %v2245 = vunpack.c.h.b16 %v1489
    %v2246 = vunpack.c.l.b16 %v1490
    %v2247 = vunpack.c.h.b16 %v1490
    %v2248 = vunpack.c.l.b16 %v1491
    %v2249 = vunpack.c.h.b16 %v1491
    %v2250 = vunpack.c.l.b16 %v1492
    %v2251 = vunpack.c.h.b16 %v1492
    %v2252 = vunpack.c.l.b16 %v1493
    %v2253 = vunpack.c.h.b16 %v1493
    %v2254 = vunpack.c.l.b16 %v1494
    %v2255 = vunpack.c.h.b16 %v1494
    %v2256 = vunpack.c.l.b16 %v1495
    %v2257 = vunpack.c.h.b16 %v1495
    %v2258 = vunpack.c.l.b16 %v1496
    %v2259 = vunpack.c.h.b16 %v1496
    %v2260 = vunpack.c.l.b16 %v1497
    %v2261 = vunpack.c.h.b16 %v1497
    %v2262 = vunpack.c.l.b16 %v1498
    %v2263 = vunpack.c.h.b16 %v1498
    %v2264 = vunpack.c.l.b16 %v1499
    %v2265 = vunpack.c.h.b16 %v1499
    %v2266 = vunpack.c.l.b16 %v1500
    %v2267 = vunpack.c.h.b16 %v1500
    %v2268 = vunpack.c.l.b16 %v1501
    %v2269 = vunpack.c.h.b16 %v1501
    %v2270 = vunpack.c.l.b16 %v1502
    %v2271 = vunpack.c.h.b16 %v1502
    %v2272 = vunpack.c.l.b16 %v1503
    %v2273 = vunpack.c.h.b16 %v1503
    %v2274 = vunpack.c.l.b16 %v1504
    %v2275 = vunpack.c.h.b16 %v1504
    %v2276 = vunpack.c.l.b16 %v1505
    %v2277 = vunpack.c.h.b16 %v1505
    %v2278 = vunpack.c.l.b16 %v1506
    %v2279 = vunpack.c.h.b16 %v1506
    %v2280 = vunpack.c.l.b16 %v1507
    %v2281 = vunpack.c.h.b16 %v1507
    %v2282 = vunpack.c.l.b16 %v1508
    %v2283 = vunpack.c.h.b16 %v1508
    %v2284 = vunpack.c.l.b16 %v1509
    %v2285 = vunpack.c.h.b16 %v1509
    %v2286 = vunpack.c.l.b16 %v1510
    %v2287 = vunpack.c.h.b16 %v1510
    %v2288 = vunpack.c.l.b16 %v1511
    %v2289 = vunpack.c.h.b16 %v1511
    %v2290 = vunpack.c.l.b16 %v1512
    %v2291 = vunpack.c.h.b16 %v1512
    %v2292 = vunpack.c.l.b16 %v1513
    %v2293 = vunpack.c.h.b16 %v1513
    %v2294 = vunpack.c.l.b16 %v1514
    %v2295 = vunpack.c.h.b16 %v1514
    %v2296 = vunpack.c.l.b16 %v1515
    %v2297 = vunpack.c.h.b16 %v1515
    %v2298 = vunpack.c.l.b16 %v1516
    %v2299 = vunpack.c.h.b16 %v1516
    %v2300 = vunpack.c.l.b16 %v1517
    %v2301 = vunpack.c.h.b16 %v1517
    %v2302 = vunpack.c.l.b16 %v1518
    %v2303 = vunpack.c.h.b16 %v1518
    %v2304 = vunpack.c.l.b16 %v1519
    %v2305 = vunpack.c.h.b16 %v1519
    %v2306 = vunpack.c.l.b16 %v1520
    %v2307 = vunpack.c.h.b16 %v1520
    %v2308 = vunpack.c.l.b16 %v1521
    %v2309 = vunpack.c.h.b16 %v1521
    %v2310 = vunpack.c.l.b16 %v1522
    %v2311 = vunpack.c.h.b16 %v1522
    %v2312 = vunpack.c.l.b16 %v1523
    %v2313 = vunpack.c.h.b16 %v1523
    %v2314 = vunpack.c.l.b16 %v1524
    %v2315 = vunpack.c.h.b16 %v1524
    %v2316 = vunpack.c.l.b16 %v1525
    %v2317 = vunpack.c.h.b16 %v1525
    %v2318 = vunpack.c.l.b16 %v1526
    %v2319 = vunpack.c.h.b16 %v1526
    %v2320 = vunpack.c.l.b16 %v1527
    %v2321 = vunpack.c.h.b16 %v1527
    %v2322 = vunpack.c.l.b16 %v1528
    %v2323 = vunpack.c.h.b16 %v1528
    %v2324 = vunpack.c.l.b16 %v1529
    %v2325 = vunpack.c.h.b16 %v1529
    %v2326 = vunpack.c.l.b16 %v1530
    %v2327 = vunpack.c.h.b16 %v1530
    %v2328 = vunpack.c.l.b16 %v1531
    %v2329 = vunpack.c.h.b16 %v1531
    %v2330 = vunpack.c.l.b16 %v1532
    %v2331 = vunpack.c.h.b16 %v1532
    %v2332 = vunpack.c.l.b16 %v1533
    %v2333 = vunpack.c.h.b16 %v1533
    %v2334 = vunpack.c.l.b16 %v1534
    %v2335 = vunpack.c.h.b16 %v1534
    %v2336 = vunpack.c.l.b16 %v1535
    %v2337 = vunpack.c.h.b16 %v1535
    %v2338 = vunpack.c.l.b16 %v1536
    %v2339 = vunpack.c.h.b16 %v1536
    %v2340 = vunpack.c.l.b16 %v1537
    %v2341 = vunpack.c.h.b16 %v1537
    %v2342 = vunpack.c.l.b16 %v1538
    %v2343 = vunpack.c.h.b16 %v1538
    %v2344 = vunpack.c.l.b16 %v1539
    %v2345 = vunpack.c.h.b16 %v1539
    %v2346 = vunpack.c.l.b16 %v1540
    %v2347 = vunpack.c.h.b16 %v1540
    %v2348 = vunpack.c.l.b16 %v1541
    %v2349 = vunpack.c.h.b16 %v1541
    %v2350 = vunpack.c.l.b16 %v1542
    %v2351 = vunpack.c.h.b16 %v1542
    %v2352 = vunpack.c.l.b16 %v1543
    %v2353 = vunpack.c.h.b16 %v1543
    %v2354 = vunpack.c.l.b16 %v1544
    %v2355 = vunpack.c.h.b16 %v1544
    %v2356 = vunpack.c.l.b16 %v1545
    %v2357 = vunpack.c.h.b16 %v1545
    %v2358 = vunpack.c.l.b16 %v1546
    %v2359 = vunpack.c.h.b16 %v1546
    %v2360 = vunpack.c.l.b16 %v1547
    %v2361 = vunpack.c.h.b16 %v1547
    %v2362 = vunpack.c.l.b16 %v1548
    %v2363 = vunpack.c.h.b16 %v1548
    %v2364 = vunpack.c.l.b16 %v1549
    %v2365 = vunpack.c.h.b16 %v1549
    %v2366 = vunpack.c.l.b16 %v1550
    %v2367 = vunpack.c.h.b16 %v1550
    %v2368 = vunpack.c.l.b16 %v1551
    %v2369 = vunpack.c.h.b16 %v1551
    %v2370 = vunpack.c.l.b16 %v1552
    %v2371 = vunpack.c.h.b16 %v1552
    %v2372 = vunpack.c.l.b16 %v1553
    %v2373 = vunpack.c.h.b16 %v1553
    %v2374 = vunpack.c.l.b16 %v1554
    %v2375 = vunpack.c.h.b16 %v1554
    %v2376 = vunpack.c.l.b16 %v1555
    %v2377 = vunpack.c.h.b16 %v1555
    %v2378 = vunpack.c.l.b16 %v1556
    %v2379 = vunpack.c.h.b16 %v1556
    %v2380 = vunpack.c.l.b16 %v1557
    %v2381 = vunpack.c.h.b16 %v1557
    %v2382 = vunpack.c.l.b16 %v1558
    %v2383 = vunpack.c.h.b16 %v1558
    %v2384 = vunpack.c.l.b16 %v1559
    %v2385 = vunpack.c.h.b16 %v1559
    %v2386 = vunpack.c.l.b16 %v1560
    %v2387 = vunpack.c.h.b16 %v1560
    %v2388 = vunpack.c.l.b16 %v1561
    %v2389 = vunpack.c.h.b16 %v1561
    %v2390 = vunpack.c.l.b16 %v1562
    %v2391 = vunpack.c.h.b16 %v1562
    %v2392 = vunpack.c.l.b16 %v1563
    %v2393 = vunpack.c.h.b16 %v1563
    %v2394 = vunpack.c.l.b16 %v1564
    %v2395 = vunpack.c.h.b16 %v1564
    %v2396 = vunpack.c.l.b16 %v1565
    %v2397 = vunpack.c.h.b16 %v1565
    %v2398 = vunpack.c.l.b16 %v1566
    %v2399 = vunpack.c.h.b16 %v1566
    %v2400 = vunpack.c.l.b16 %v1567
    %v2401 = vunpack.c.h.b16 %v1567
    %v2402 = vunpack.c.l.b16 %v1568
    %v2403 = vunpack.c.h.b16 %v1568
    %v2404 = vunpack.c.l.b16 %v1569
    %v2405 = vunpack.c.h.b16 %v1569
    %v2406 = vunpack.c.l.b16 %v1570
    %v2407 = vunpack.c.h.b16 %v1570
    %v2408 = vunpack.c.l.b16 %v1571
    %v2409 = vunpack.c.h.b16 %v1571
    %v2410 = vunpack.c.l.b16 %v1572
    %v2411 = vunpack.c.h.b16 %v1572
    %v2412 = vunpack.c.l.b16 %v1573
    %v2413 = vunpack.c.h.b16 %v1573
    %v2414 = vunpack.c.l.b16 %v1574
    %v2415 = vunpack.c.h.b16 %v1574
    %v2416 = vunpack.c.l.b16 %v1575
    %v2417 = vunpack.c.h.b16 %v1575
    %v2418 = vunpack.c.l.b16 %v1576
    %v2419 = vunpack.c.h.b16 %v1576
    %v2420 = vunpack.c.l.b16 %v1577
    %v2421 = vunpack.c.h.b16 %v1577
    %v2422 = vunpack.c.l.b16 %v1578
    %v2423 = vunpack.c.h.b16 %v1578
    %v2424 = vunpack.c.l.b16 %v1579
    %v2425 = vunpack.c.h.b16 %v1579
    %v2426 = vunpack.c.l.b16 %v1580
    %v2427 = vunpack.c.h.b16 %v1580
    %v2428 = vunpack.c.l.b16 %v1581
    %v2429 = vunpack.c.h.b16 %v1581
    %v2430 = vunpack.c.l.b16 %v1582
    %v2431 = vunpack.c.h.b16 %v1582
    %v2432 = vunpack.c.l.b16 %v1583
    %v2433 = vunpack.c.h.b16 %v1583
    %v2434 = vunpack.c.l.b16 %v1584
    %v2435 = vunpack.c.h.b16 %v1584
    %v2436 = vunpack.c.l.b16 %v1585
    %v2437 = vunpack.c.h.b16 %v1585
    %v2438 = vunpack.c.l.b16 %v1586
    %v2439 = vunpack.c.h.b16 %v1586
    %v2440 = vunpack.c.l.b16 %v1587
    %v2441 = vunpack.c.h.b16 %v1587
    %v2442 = vunpack.c.l.b16 %v1588
    %v2443 = vunpack.c.h.b16 %v1588
    %v2444 = vunpack.c.l.b16 %v1589
    %v2445 = vunpack.c.h.b16 %v1589
    %v2446 = vunpack.c.l.b16 %v1590
    %v2447 = vunpack.c.h.b16 %v1590
    %v2448 = vunpack.c.l.b16 %v1591
    %v2449 = vunpack.c.h.b16 %v1591
    %v2450 = vunpack.c.l.b16 %v1592
    %v2451 = vunpack.c.h.b16 %v1592
    %v2452 = vunpack.c.l.b16 %v1593
    %v2453 = vunpack.c.h.b16 %v1593
    %v2454 = vunpack.c.l.b16 %v1594
    %v2455 = vunpack.c.h.b16 %v1594
    %v2456 = vunpack.c.l.b16 %v1595
    %v2457 = vunpack.c.h.b16 %v1595
    %v2458 = vunpack.c.l.b16 %v1596
    %v2459 = vunpack.c.h.b16 %v1596
    %v2460 = vunpack.c.l.b16 %v1597
    %v2461 = vunpack.c.h.b16 %v1597
    %v2462 = vunpack.c.l.b16 %v1598
    %v2463 = vunpack.c.h.b16 %v1598
    %v2464 = vunpack.c.l.b16 %v1599
    %v2465 = vunpack.c.h.b16 %v1599
    %v2466 = vunpack.c.l.b16 %v1600
    %v2467 = vunpack.c.h.b16 %v1600
    %v2468 = vunpack.c.l.b16 %v1601
    %v2469 = vunpack.c.h.b16 %v1601
    %v2470 = vunpack.c.l.b16 %v1602
    %v2471 = vunpack.c.h.b16 %v1602
    %v2472 = vunpack.c.l.b16 %v1603
    %v2473 = vunpack.c.h.b16 %v1603
    %v2474 = vunpack.c.l.b16 %v1604
    %v2475 = vunpack.c.h.b16 %v1604
    %v2476 = vunpack.c.l.b16 %v1605
    %v2477 = vunpack.c.h.b16 %v1605
    %v2478 = vunpack.c.l.b16 %v1606
    %v2479 = vunpack.c.h.b16 %v1606
    %v2480 = vpack.c.b16 %v2232, %v2224
    %v2481 = vpack.c.b16 %v2233, %v2225
    %v2482 = vpack.c.b16 %v2234, %v2226
    %v2483 = vpack.c.b16 %v2235, %v2227
    %v2484 = vpack.c.b16 %v2236, %v2228
    %v2485 = vpack.c.b16 %v2237, %v2229
    %v2486 = vpack.c.b16 %v2238, %v2230
    %v2487 = vpack.c.b16 %v2239, %v2231
    %v2488 = vpack.c.b16 %v2248, %v2240
    %v2489 = vpack.c.b16 %v2249, %v2241
    %v2490 = vpack.c.b16 %v2250, %v2242
    %v2491 = vpack.c.b16 %v2251, %v2243
    %v2492 = vpack.c.b16 %v2252, %v2244
    %v2493 = vpack.c.b16 %v2253, %v2245
    %v2494 = vpack.c.b16 %v2254, %v2246
    %v2495 = vpack.c.b16 %v2255, %v2247
    %v2496 = vpack.c.b16 %v2264, %v2256
    %v2497 = vpack.c.b16 %v2265, %v2257
    %v2498 = vpack.c.b16 %v2266, %v2258
    %v2499 = vpack.c.b16 %v2267, %v2259
    %v2500 = vpack.c.b16 %v2268, %v2260
    %v2501 = vpack.c.b16 %v2269, %v2261
    %v2502 = vpack.c.b16 %v2270, %v2262
    %v2503 = vpack.c.b16 %v2271, %v2263
    %v2504 = vpack.c.b16 %v2280, %v2272
    %v2505 = vpack.c.b16 %v2281, %v2273
    %v2506 = vpack.c.b16 %v2282, %v2274
    %v2507 = vpack.c.b16 %v2283, %v2275
    %v2508 = vpack.c.b16 %v2284, %v2276
    %v2509 = vpack.c.b16 %v2285, %v2277
    %v2510 = vpack.c.b16 %v2286, %v2278
    %v2511 = vpack.c.b16 %v2287, %v2279
    %v2512 = vpack.c.b16 %v2296, %v2288
    %v2513 = vpack.c.b16 %v2297, %v2289
    %v2514 = vpack.c.b16 %v2298, %v2290
    %v2515 = vpack.c.b16 %v2299, %v2291
    %v2516 = vpack.c.b16 %v2300, %v2292
    %v2517 = vpack.c.b16 %v2301, %v2293
    %v2518 = vpack.c.b16 %v2302, %v2294
    %v2519 = vpack.c.b16 %v2303, %v2295
    %v2520 = vpack.c.b16 %v2312, %v2304
    %v2521 = vpack.c.b16 %v2313, %v2305
    %v2522 = vpack.c.b16 %v2314, %v2306
    %v2523 = vpack.c.b16 %v2315, %v2307
    %v2524 = vpack.c.b16 %v2316, %v2308
    %v2525 = vpack.c.b16 %v2317, %v2309
    %v2526 = vpack.c.b16 %v2318, %v2310
    %v2527 = vpack.c.b16 %v2319, %v2311
    %v2528 = vpack.c.b16 %v2328, %v2320
    %v2529 = vpack.c.b16 %v2329, %v2321
    %v2530 = vpack.c.b16 %v2330, %v2322
    %v2531 = vpack.c.b16 %v2331, %v2323
    %v2532 = vpack.c.b16 %v2332, %v2324
    %v2533 = vpack.c.b16 %v2333, %v2325
    %v2534 = vpack.c.b16 %v2334, %v2326
    %v2535 = vpack.c.b16 %v2335, %v2327
    %v2536 = vpack.c.b16 %v2344, %v2336
    %v2537 = vpack.c.b16 %v2345, %v2337
    %v2538 = vpack.c.b16 %v2346, %v2338
    %v2539 = vpack.c.b16 %v2347, %v2339
    %v2540 = vpack.c.b16 %v2348, %v2340
    %v2541 = vpack.c.b16 %v2349, %v2341
    %v2542 = vpack.c.b16 %v2350, %v2342
    %v2543 = vpack.c.b16 %v2351, %v2343
    %v2544 = vpack.c.b16 %v2360, %v2352
    %v2545 = vpack.c.b16 %v2361, %v2353
    %v2546 = vpack.c.b16 %v2362, %v2354
    %v2547 = vpack.c.b16 %v2363, %v2355
    %v2548 = vpack.c.b16 %v2364, %v2356
    %v2549 = vpack.c.b16 %v2365, %v2357
    %v2550 = vpack.c.b16 %v2366, %v2358
    %v2551 = vpack.c.b16 %v2367, %v2359
    %v2552 = vpack.c.b16 %v2376, %v2368
    %v2553 = vpack.c.b16 %v2377, %v2369
    %v2554 = vpack.c.b16 %v2378, %v2370
    %v2555 = vpack.c.b16 %v2379, %v2371
    %v2556 = vpack.c.b16 %v2380, %v2372
    %v2557 = vpack.c.b16 %v2381, %v2373
    %v2558 = vpack.c.b16 %v2382, %v2374
    %v2559 = vpack.c.b16 %v2383, %v2375
    %v2560 = vpack.c.b16 %v2392, %v2384
    %v2561 = vpack.c.b16 %v2393, %v2385
    %v2562 = vpack.c.b16 %v2394, %v2386
    %v2563 = vpack.c.b16 %v2395, %v2387
    %v2564 = vpack.c.b16 %v2396, %v2388
    %v2565 = vpack.c.b16 %v2397, %v2389
    %v2566 = vpack.c.b16 %v2398, %v2390
    %v2567 = vpack.c.b16 %v2399, %v2391
    %v2568 = vpack.c.b16 %v2408, %v2400
    %v2569 = vpack.c.b16 %v2409, %v2401
    %v2570 = vpack.c.b16 %v2410, %v2402
    %v2571 = vpack.c.b16 %v2411, %v2403
    %v2572 = vpack.c.b16 %v2412, %v2404
    %v2573 = vpack.c.b16 %v2413, %v2405
    %v2574 = vpack.c.b16 %v2414, %v2406
    %v2575 = vpack.c.b16 %v2415, %v2407
    %v2576 = vpack.c.b16 %v2424, %v2416
    %v2577 = vpack.c.b16 %v2425, %v2417
    %v2578 = vpack.c.b16 %v2426, %v2418
    %v2579 = vpack.c.b16 %v2427, %v2419
    %v2580 = vpack.c.b16 %v2428, %v2420
    %v2581 = vpack.c.b16 %v2429, %v2421
    %v2582 = vpack.c.b16 %v2430, %v2422
    %v2583 = vpack.c.b16 %v2431, %v2423
    %v2584 = vpack.c.b16 %v2440, %v2432
    %v2585 = vpack.c.b16 %v2441, %v2433
    %v2586 = vpack.c.b16 %v2442, %v2434
    %v2587 = vpack.c.b16 %v2443, %v2435
    %v2588 = vpack.c.b16 %v2444, %v2436
    %v2589 = vpack.c.b16 %v2445, %v2437
    %v2590 = vpack.c.b16 %v2446, %v2438
    %v2591 = vpack.c.b16 %v2447, %v2439
    %v2592 = vpack.c.b16 %v2456, %v2448
    %v2593 = vpack.c.b16 %v2457, %v2449
    %v2594 = vpack.c.b16 %v2458, %v2450
    %v2595 = vpack.c.b16 %v2459, %v2451
    %v2596 = vpack.c.b16 %v2460, %v2452
    %v2597 = vpack.c.b16 %v2461, %v2453
    %v2598 = vpack.c.b16 %v2462, %v2454
    %v2599 = vpack.c.b16 %v2463, %v2455
    %v2600 = vpack.c.b16 %v2472, %v2464
    %v2601 = vpack.c.b16 %v2473, %v2465
    %v2602 = vpack.c.b16 %v2474, %v2466
    %v2603 = vpack.c.b16 %v2475, %v2467
    %v2604 = vpack.c.b16 %v2476, %v2468
    %v2605 = vpack.c.b16 %v2477, %v2469
    %v2606 = vpack.c.b16 %v2478, %v2470
    %v2607 = vpack.c.b16 %v2479, %v2471
    %2736 = vmatpush.bf16.msra.mxu0 %v2536
    %2737 = vmatpush.bf16.msra.mxu0 %v2528
    %2738 = vmatpush.bf16.msra.mxu0 %v2520
    %2739 = vmatpush.bf16.msra.mxu0 %v2512
    %2740 = vmatpush.bf16.msra.mxu0 %v2504
    %2741 = vmatpush.bf16.msra.mxu0 %v2496
    %2742 = vmatpush.bf16.msra.mxu0 %v2488
    %2743 = vmatpush.bf16.msra.mxu0 %v2480
    %2744 = vmatmul.bf16.gmra.mxu0 %v1477
    %v2745 = vpop.f32.mrf.mxu0
    %v2746 = vadd.f32 %v2002, %v2745
    %v2747 = vpop.f32.mrf.mxu0
    %2748 = vdwg.mxu0
    %2749 = vmatpush.bf16.msra.mxu0 %v2600
    %2750 = vmatpush.bf16.msra.mxu0 %v2592
    %2751 = vmatpush.bf16.msra.mxu0 %v2584
    %2752 = vmatpush.bf16.msra.mxu0 %v2576
    %2753 = vmatpush.bf16.msra.mxu0 %v2568
    %2754 = vmatpush.bf16.msra.mxu0 %v2560
    %2755 = vmatpush.bf16.msra.mxu0 %v2552
    %2756 = vmatpush.bf16.msra.mxu0 %v2544
    %2757 = vmatmul.bf16.gmra.mxu0 %v1478
    %v2758 = vpop.f32.mrf.mxu0
    %v2759 = vadd.f32 %v2746, %v2758
    %v2760 = vpop.f32.mrf.mxu0
    %2761 = vdwg.mxu0
    %2762 = vmatpush.bf16.msra.mxu0 %v2537
    %2763 = vmatpush.bf16.msra.mxu0 %v2529
    %2764 = vmatpush.bf16.msra.mxu0 %v2521
    %2765 = vmatpush.bf16.msra.mxu0 %v2513
    %2766 = vmatpush.bf16.msra.mxu0 %v2505
    %2767 = vmatpush.bf16.msra.mxu0 %v2497
    %2768 = vmatpush.bf16.msra.mxu0 %v2489
    %2769 = vmatpush.bf16.msra.mxu0 %v2481
    %2770 = vmatmul.bf16.gmra.mxu0 %v1477
    %v2771 = vpop.f32.mrf.mxu0
    %v2772 = vadd.f32 %v2015, %v2771
    %v2773 = vpop.f32.mrf.mxu0
    %2774 = vdwg.mxu0
    %2775 = vmatpush.bf16.msra.mxu0 %v2601
    %2776 = vmatpush.bf16.msra.mxu0 %v2593
    %2777 = vmatpush.bf16.msra.mxu0 %v2585
    %2778 = vmatpush.bf16.msra.mxu0 %v2577
    %2779 = vmatpush.bf16.msra.mxu0 %v2569
    %2780 = vmatpush.bf16.msra.mxu0 %v2561
    %2781 = vmatpush.bf16.msra.mxu0 %v2553
    %2782 = vmatpush.bf16.msra.mxu0 %v2545
    %2783 = vmatmul.bf16.gmra.mxu0 %v1478
    %v2784 = vpop.f32.mrf.mxu0
    %v2785 = vadd.f32 %v2772, %v2784
    %v2786 = vpop.f32.mrf.mxu0
    %2787 = vdwg.mxu0
    %2788 = vmatpush.bf16.msra.mxu0 %v2538
    %2789 = vmatpush.bf16.msra.mxu0 %v2530
    %2790 = vmatpush.bf16.msra.mxu0 %v2522
    %2791 = vmatpush.bf16.msra.mxu0 %v2514
    %2792 = vmatpush.bf16.msra.mxu0 %v2506
    %2793 = vmatpush.bf16.msra.mxu0 %v2498
    %2794 = vmatpush.bf16.msra.mxu0 %v2490
    %2795 = vmatpush.bf16.msra.mxu0 %v2482
    %2796 = vmatmul.bf16.gmra.mxu0 %v1477
    %v2797 = vpop.f32.mrf.mxu0
    %v2798 = vadd.f32 %v2028, %v2797
    %v2799 = vpop.f32.mrf.mxu0
    %2800 = vdwg.mxu0
    %2801 = vmatpush.bf16.msra.mxu0 %v2602
    %2802 = vmatpush.bf16.msra.mxu0 %v2594
    %2803 = vmatpush.bf16.msra.mxu0 %v2586
    %2804 = vmatpush.bf16.msra.mxu0 %v2578
    %2805 = vmatpush.bf16.msra.mxu0 %v2570
    %2806 = vmatpush.bf16.msra.mxu0 %v2562
    %2807 = vmatpush.bf16.msra.mxu0 %v2554
    %2808 = vmatpush.bf16.msra.mxu0 %v2546
    %2809 = vmatmul.bf16.gmra.mxu0 %v1478
    %v2810 = vpop.f32.mrf.mxu0
    %v2811 = vadd.f32 %v2798, %v2810
    %v2812 = vpop.f32.mrf.mxu0
    %2813 = vdwg.mxu0
    %2814 = vmatpush.bf16.msra.mxu0 %v2539
    %2815 = vmatpush.bf16.msra.mxu0 %v2531
    %2816 = vmatpush.bf16.msra.mxu0 %v2523
    %2817 = vmatpush.bf16.msra.mxu0 %v2515
    %2818 = vmatpush.bf16.msra.mxu0 %v2507
    %2819 = vmatpush.bf16.msra.mxu0 %v2499
    %2820 = vmatpush.bf16.msra.mxu0 %v2491
    %2821 = vmatpush.bf16.msra.mxu0 %v2483
    %2822 = vmatmul.bf16.gmra.mxu0 %v1477
    %v2823 = vpop.f32.mrf.mxu0
    %v2824 = vadd.f32 %v2041, %v2823
    %v2825 = vpop.f32.mrf.mxu0
    %2826 = vdwg.mxu0
    %2827 = vmatpush.bf16.msra.mxu0 %v2603
    %2828 = vmatpush.bf16.msra.mxu0 %v2595
    %2829 = vmatpush.bf16.msra.mxu0 %v2587
    %2830 = vmatpush.bf16.msra.mxu0 %v2579
    %2831 = vmatpush.bf16.msra.mxu0 %v2571
    %2832 = vmatpush.bf16.msra.mxu0 %v2563
    %2833 = vmatpush.bf16.msra.mxu0 %v2555
    %2834 = vmatpush.bf16.msra.mxu0 %v2547
    %2835 = vmatmul.bf16.gmra.mxu0 %v1478
    %v2836 = vpop.f32.mrf.mxu0
    %v2837 = vadd.f32 %v2824, %v2836
    %v2838 = vpop.f32.mrf.mxu0
    %2839 = vdwg.mxu0
    %2840 = vmatpush.bf16.msra.mxu0 %v2540
    %2841 = vmatpush.bf16.msra.mxu0 %v2532
    %2842 = vmatpush.bf16.msra.mxu0 %v2524
    %2843 = vmatpush.bf16.msra.mxu0 %v2516
    %2844 = vmatpush.bf16.msra.mxu0 %v2508
    %2845 = vmatpush.bf16.msra.mxu0 %v2500
    %2846 = vmatpush.bf16.msra.mxu0 %v2492
    %2847 = vmatpush.bf16.msra.mxu0 %v2484
    %2848 = vmatmul.bf16.gmra.mxu0 %v1477
    %v2849 = vpop.f32.mrf.mxu0
    %v2850 = vadd.f32 %v2054, %v2849
    %v2851 = vpop.f32.mrf.mxu0
    %2852 = vdwg.mxu0
    %2853 = vmatpush.bf16.msra.mxu0 %v2604
    %2854 = vmatpush.bf16.msra.mxu0 %v2596
    %2855 = vmatpush.bf16.msra.mxu0 %v2588
    %2856 = vmatpush.bf16.msra.mxu0 %v2580
    %2857 = vmatpush.bf16.msra.mxu0 %v2572
    %2858 = vmatpush.bf16.msra.mxu0 %v2564
    %2859 = vmatpush.bf16.msra.mxu0 %v2556
    %2860 = vmatpush.bf16.msra.mxu0 %v2548
    %2861 = vmatmul.bf16.gmra.mxu0 %v1478
    %v2862 = vpop.f32.mrf.mxu0
    %v2863 = vadd.f32 %v2850, %v2862
    %v2864 = vpop.f32.mrf.mxu0
    %2865 = vdwg.mxu0
    %2866 = vmatpush.bf16.msra.mxu0 %v2541
    %2867 = vmatpush.bf16.msra.mxu0 %v2533
    %2868 = vmatpush.bf16.msra.mxu0 %v2525
    %2869 = vmatpush.bf16.msra.mxu0 %v2517
    %2870 = vmatpush.bf16.msra.mxu0 %v2509
    %2871 = vmatpush.bf16.msra.mxu0 %v2501
    %2872 = vmatpush.bf16.msra.mxu0 %v2493
    %2873 = vmatpush.bf16.msra.mxu0 %v2485
    %2874 = vmatmul.bf16.gmra.mxu0 %v1477
    %v2875 = vpop.f32.mrf.mxu0
    %v2876 = vadd.f32 %v2067, %v2875
    %v2877 = vpop.f32.mrf.mxu0
    %2878 = vdwg.mxu0
    %2879 = vmatpush.bf16.msra.mxu0 %v2605
    %2880 = vmatpush.bf16.msra.mxu0 %v2597
    %2881 = vmatpush.bf16.msra.mxu0 %v2589
    %2882 = vmatpush.bf16.msra.mxu0 %v2581
    %2883 = vmatpush.bf16.msra.mxu0 %v2573
    %2884 = vmatpush.bf16.msra.mxu0 %v2565
    %2885 = vmatpush.bf16.msra.mxu0 %v2557
    %2886 = vmatpush.bf16.msra.mxu0 %v2549
    %2887 = vmatmul.bf16.gmra.mxu0 %v1478
    %v2888 = vpop.f32.mrf.mxu0
    %v2889 = vadd.f32 %v2876, %v2888
    %v2890 = vpop.f32.mrf.mxu0
    %2891 = vdwg.mxu0
    %2892 = vmatpush.bf16.msra.mxu0 %v2542
    %2893 = vmatpush.bf16.msra.mxu0 %v2534
    %2894 = vmatpush.bf16.msra.mxu0 %v2526
    %2895 = vmatpush.bf16.msra.mxu0 %v2518
    %2896 = vmatpush.bf16.msra.mxu0 %v2510
    %2897 = vmatpush.bf16.msra.mxu0 %v2502
    %2898 = vmatpush.bf16.msra.mxu0 %v2494
    %2899 = vmatpush.bf16.msra.mxu0 %v2486
    %2900 = vmatmul.bf16.gmra.mxu0 %v1477
    %v2901 = vpop.f32.mrf.mxu0
    %v2902 = vadd.f32 %v2080, %v2901
    %v2903 = vpop.f32.mrf.mxu0
    %2904 = vdwg.mxu0
    %2905 = vmatpush.bf16.msra.mxu0 %v2606
    %2906 = vmatpush.bf16.msra.mxu0 %v2598
    %2907 = vmatpush.bf16.msra.mxu0 %v2590
    %2908 = vmatpush.bf16.msra.mxu0 %v2582
    %2909 = vmatpush.bf16.msra.mxu0 %v2574
    %2910 = vmatpush.bf16.msra.mxu0 %v2566
    %2911 = vmatpush.bf16.msra.mxu0 %v2558
    %2912 = vmatpush.bf16.msra.mxu0 %v2550
    %2913 = vmatmul.bf16.gmra.mxu0 %v1478
    %v2914 = vpop.f32.mrf.mxu0
    %v2915 = vadd.f32 %v2902, %v2914
    %v2916 = vpop.f32.mrf.mxu0
    %2917 = vdwg.mxu0
    %2918 = vmatpush.bf16.msra.mxu0 %v2543
    %2919 = vmatpush.bf16.msra.mxu0 %v2535
    %2920 = vmatpush.bf16.msra.mxu0 %v2527
    %2921 = vmatpush.bf16.msra.mxu0 %v2519
    %2922 = vmatpush.bf16.msra.mxu0 %v2511
    %2923 = vmatpush.bf16.msra.mxu0 %v2503
    %2924 = vmatpush.bf16.msra.mxu0 %v2495
    %2925 = vmatpush.bf16.msra.mxu0 %v2487
    %2926 = vmatmul.bf16.gmra.mxu0 %v1477
    %v2927 = vpop.f32.mrf.mxu0
    %v2928 = vadd.f32 %v2093, %v2927
    %v2929 = vpop.f32.mrf.mxu0
    %2930 = vdwg.mxu0
    %2931 = vmatpush.bf16.msra.mxu0 %v2607
    %2932 = vmatpush.bf16.msra.mxu0 %v2599
    %2933 = vmatpush.bf16.msra.mxu0 %v2591
    %2934 = vmatpush.bf16.msra.mxu0 %v2583
    %2935 = vmatpush.bf16.msra.mxu0 %v2575
    %2936 = vmatpush.bf16.msra.mxu0 %v2567
    %2937 = vmatpush.bf16.msra.mxu0 %v2559
    %2938 = vmatpush.bf16.msra.mxu0 %v2551
    %2939 = vmatmul.bf16.gmra.mxu0 %v1478
    %v2940 = vpop.f32.mrf.mxu0
    %v2941 = vadd.f32 %v2928, %v2940
    %v2942 = vpop.f32.mrf.mxu0
    %2943 = vdwg.mxu0
    %v2944 = vld [vmem:[%s8] sm:$0xff]
    %v2946 = vperm.slane %v2944, 0
    %v2947 = vperm.slane %v2944, 1
    %v2948 = vperm.slane %v2944, 2
    %v2949 = vperm.slane %v2944, 3
    %v2950 = vperm.slane %v2944, 4
    %v2951 = vperm.slane %v2944, 5
    %v2952 = vperm.slane %v2944, 6
    %v2953 = vperm.slane %v2944, 7
    %v2962 = vadd.f32 %v2759, %v2946
    %v2963 = vadd.f32 %v2785, %v2947
    %v2964 = vadd.f32 %v2811, %v2948
    %v2965 = vadd.f32 %v2837, %v2949
    %v2966 = vadd.f32 %v2863, %v2950
    %v2967 = vadd.f32 %v2889, %v2951
    %v2968 = vadd.f32 %v2915, %v2952
    %v2969 = vadd.f32 %v2941, %v2953
    %v2970 = vmax.f32 %v2962, %v2964
    %v2971 = vmax.f32 %v2963, %v2965
    %v2972 = vmax.f32 %v2970, %v2966
    %v2973 = vmax.f32 %v2971, %v2967
    %v2974 = vmax.f32 %v2972, %v2968
    %v2975 = vmax.f32 %v2973, %v2969
    %v2976 = vld [vmem:[%s9] sm:$0x3]
    %v2978 = vperm.slane %v2976, 0
    %v2979 = vperm.slane %v2976, 1
    %v2982 = vmul.f32 %v2974, %v2978
    %v2983 = vmul.f32 %v2975, %v2979
    %v2984 = vadd.f32 %v2982, %v2983
    %2985 = vadd.xlane.f32.xlu0 %v2984
    %v2986 = vpop.xlane.xlu0 %2985
    %v2987 = vld [vmem:[#allocation2] sm:$0x1]
    %v2989 = vperm.slane %v2987, 0
    %v2991 = vadd.f32 %v2986, %v2989
    %v2992 = vxor.u32 %v2991, 2147483648
    %v2993 = vmul.f32 %v2992, 1.442695
    %v2994 = vpow.pop %v2993
    %v2995 = vadd.f32 %v2994, 1.0
    %v2996 = vrcp.pop %v2995
    %v2997 = vmul.f32 %v2995, %v2996
    %v2998 = vsub.f32 1.0, %v2997
    %v2999 = vmul.f32 %v2996, %v2998
    %v3000 = vadd.f32 %v2996, %v2999
    %vm3001 = vweird.f32 %v2995
    %vm3002 = vweird.f32 %v2996
    %vm3003 = vmor %vm3001, %vm3002
    %v3004 = vsel %vm3003, %v2996, %v3000
    %v3005 = vand.u32 2147483647, %v2995
    %vm3006 = vcmp.eq.f32.partialorder %v3005, 8.507059e+37
    %v3007 = vand.u32 %v2995, 2147483648
    %v3008 = vor.u32 1.1754944e-38, %v3007
    %v3009 = vsel %vm3006, %v3008, %v3004
    %v3010 = vmul.f32 1.0, %v3009
    %vm3011 = vcmask 7168
    %3012 = vst.msk [vmem:[%s11] sm:$0xff] %vm3011, %v3010
    // Predicated region
    $region58: #{discriminator_forward.1} parent=1 // pred_check
      _
    $region59: #{discriminator_forward.1} parent=1 // pred_check_branch
      %3014 = sbr.rel (0) target = $region61
    $region60: #{discriminator_forward.1} parent=1 // pred_region
      _
    $region61: #{discriminator_forward.1} parent=1 // pred_fallthru
      _
    // Predicated region
    $region62: #{discriminator_forward.1} parent=1 // pred_check
      _
    $region63: #{discriminator_forward.1} parent=1 // pred_check_branch
      %3016 = sbr.rel (0) target = $region65
    $region64: #{discriminator_forward.1} parent=1 // pred_region
      _
    $region65: #{discriminator_forward.1} parent=1 // pred_fallthru
      _
    %3017 = vsyncpa [#allocation4], 1
    %3018 = vsyncpa [#allocation6], 1

</llo_original>
